<compile_context>
chip_gen: v7x
topology: tpu7x:2x2x1
jax: 0.10.0
libtpu: 0.0.40
codegen_flags: <defaults>
</compile_context>

<pallas_src>
import math
import functools

import jax
import jax.numpy as jnp
from jax.experimental import pallas as pl
from jax.experimental.pallas import tpu as pltpu  # noqa: F401  (kept for TPU-specific extensions)


# --------------------------------------------------------------------------
# In-kernel helpers (pure jnp, traced inside the Pallas kernel body)
# --------------------------------------------------------------------------
def _layer_norm(t, g, b, eps=1e-5):
    mu = jnp.mean(t, axis=-1, keepdims=True)
    var = jnp.mean(jnp.square(t - mu), axis=-1, keepdims=True)
    return (t - mu) * jax.lax.rsqrt(var + eps) * g + b


# --------------------------------------------------------------------------
# Whole-layer, whole-batch kernel (single invocation, everything in VMEM)
# --------------------------------------------------------------------------
def _encoder_layer_kernel(x_ref, bias_ref, rowmask_ref,
                          wqkv_ref, bqkv_ref, wo_ref, bo_ref,
                          g1_ref, be1_ref,
                          w1_ref, b1_ref, w2_ref, b2_ref,
                          g2_ref, be2_ref,
                          o_ref, *, batch, seq, n_heads):
    f32 = jnp.float32
    x = x_ref[...]                                   # (B*S, D)
    BS, D = x.shape
    H = n_heads
    dph = D // H
    inv_scale = 1.0 / math.sqrt(dph)                 # Python float (not a captured array)

    # ---- fused QKV projection: one full-width MXU pass --------------------
    qkv = jnp.dot(x, wqkv_ref[...], preferred_element_type=f32) + bqkv_ref[...]   # (BS, 3D)

    bias = bias_ref[...]                             # (B, 1, S) additive mask (0 / -1e20)

    # ---- attention: batched over B, static loop over heads ----------------
    ctx_heads = []
    for h in range(H):
        q = qkv[:, h * dph:(h + 1) * dph].reshape(batch, seq, dph) * inv_scale
        k = qkv[:, D + h * dph:D + (h + 1) * dph].reshape(batch, seq, dph)
        v = qkv[:, 2 * D + h * dph:2 * D + (h + 1) * dph].reshape(batch, seq, dph)

        logits = jax.lax.dot_general(q, k, (((2,), (2,)), ((0,), (0,))),
                                     preferred_element_type=f32)          # (B, S, S)
        logits = logits + bias
        m = jnp.max(logits, axis=-1, keepdims=True)
        e = jnp.exp(logits - m)
        p = e * pl.reciprocal(jnp.sum(e, axis=-1, keepdims=True), approx=True)
        ctx = jax.lax.dot_general(p, v, (((2,), (1,)), ((0,), (0,))),
                                  preferred_element_type=f32)             # (B, S, dph)
        ctx_heads.append(ctx.reshape(BS, dph))

    ctx2 = jnp.concatenate(ctx_heads, axis=-1)        # (BS, D), head-major lane order

    # ---- output projection: one (BS,D)@(D,D) matmul ------------------------
    attn = jnp.dot(ctx2, wo_ref[...], preferred_element_type=f32) + bo_ref[...]

    # ---- residual + LayerNorm 1 --------------------------------------------
    x1 = _layer_norm(x + attn, g1_ref[...], be1_ref[...])

    # ---- FFN (ReLU) ---------------------------------------------------------
    h1 = jnp.maximum(
        jnp.dot(x1, w1_ref[...], preferred_element_type=f32) + b1_ref[...], 0.0)
    ffo = jnp.dot(h1, w2_ref[...], preferred_element_type=f32) + b2_ref[...]

    # ---- residual + LayerNorm 2 + final padding-mask multiply ---------------
    x2 = _layer_norm(x1 + ffo, g2_ref[...], be2_ref[...])
    o_ref[...] = x2 * rowmask_ref[...]                # (BS, D) * (BS, 1)


# --------------------------------------------------------------------------
# Wrapper: weight fusing + mask precompute (plain JAX, free) + pallas_call
# --------------------------------------------------------------------------
def transformer_encoder_layer(tensor, mask, params, n_heads):
    (wq, bq, wk, bk, wv, bv, wo, bo,
     g1, be1, w1, b1, w2, b2, g2, be2) = params
    B, S, D = tensor.shape
    H = n_heads

    # Fused QKV weight/bias: columns = [Wq | Wk | Wv]  (head h occupies columns
    # h*dph:(h+1)*dph inside each D-wide block, matching the reference layout).
    wqkv = jnp.concatenate([wq, wk, wv], axis=1)             # (D, 3D)
    bqkv = jnp.concatenate([bq, bk, bv], axis=1)             # (1, 3D)

    # Additive attention mask (0 for keep, -1e20 for pad) and final row mask.
    attn_bias = jnp.where(mask == 0, -1e20, 0.0).astype(jnp.float32).reshape(B, 1, S)
    row_mask = mask.astype(jnp.float32).reshape(B * S, 1)

    x2d = tensor.reshape(B * S, D).astype(jnp.float32)

    kernel = functools.partial(_encoder_layer_kernel, batch=B, seq=S, n_heads=H)

    out2d = pl.pallas_call(
        kernel,
        out_shape=jax.ShapeDtypeStruct((B * S, D), jnp.float32),
        # No grid: whole (tiny) problem is one VMEM-resident invocation; default
        # whole-array BlockSpecs place every operand in VMEM.
    )(x2d, attn_bias, row_mask, wqkv, bqkv, wo, bo,
      g1, be1, w1, b1, w2, b2, g2, be2)

    return out2d.reshape(B, S, D)


# --------------------------------------------------------------------------
# Deterministic parameter construction (shapes per module __init__)
# --------------------------------------------------------------------------
def init_params(key, dim, ffn_size):
    keys = jax.random.split(key, 16)
    kit = iter(keys)

    def nxt():
        return next(kit)

    def xavier_normal(shape):
        fan_in, fan_out = shape
        std = math.sqrt(2.0 / (fan_in + fan_out))
        return std * jax.random.normal(nxt(), shape, jnp.float32)

    def xavier_uniform(shape):
        fan_in, fan_out = shape
        a = math.sqrt(6.0 / (fan_in + fan_out))
        return jax.random.uniform(nxt(), shape, jnp.float32, -a, a)

    def bias(fan_in, n):
        bound = 1.0 / math.sqrt(fan_in)
        return jax.random.uniform(nxt(), (1, n), jnp.float32, -bound, bound)

    wq, bq = xavier_normal((dim, dim)), bias(dim, dim)
    wk, bk = xavier_normal((dim, dim)), bias(dim, dim)
    wv, bv = xavier_normal((dim, dim)), bias(dim, dim)
    wo, bo = xavier_normal((dim, dim)), bias(dim, dim)
    g1, be1 = jnp.ones((1, dim), jnp.float32), jnp.zeros((1, dim), jnp.float32)
    w1, b1 = xavier_uniform((dim, ffn_size)), bias(dim, ffn_size)
    w2, b2 = xavier_uniform((ffn_size, dim)), bias(ffn_size, dim)
    g2, be2 = jnp.ones((1, dim), jnp.float32), jnp.zeros((1, dim), jnp.float32)
    return (wq, bq, wk, bk, wv, bv, wo, bo, g1, be1, w1, b1, w2, b2, g2, be2)


# --------------------------------------------------------------------------
# Pure-JAX reference (mirrors the PyTorch forward) for a sanity check
# --------------------------------------------------------------------------
def reference_forward(x, mask, params, n_heads):
    (wq, bq, wk, bk, wv, bv, wo, bo,
     g1, be1, w1, b1, w2, b2, g2, be2) = params
    B, S, D = x.shape
    H = n_heads
    dph = D // H

    def split_heads(t):
        return jnp.transpose(t.reshape(B, S, H, dph), (0, 2, 1, 3))

    q = split_heads(jnp.einsum('bsd,de->bse', x, wq) + bq) / math.sqrt(dph)
    k = split_heads(jnp.einsum('bsd,de->bse', x, wk) + bk)
    v = split_heads(jnp.einsum('bsd,de->bse', x, wv) + bv)
    logits = jnp.einsum('bhqd,bhkd->bhqk', q, k)
    logits = jnp.where((mask == 0)[:, None, None, :], -1e20, logits)
    p = jax.nn.softmax(logits, axis=-1)
    ctx = jnp.einsum('bhqk,bhkd->bhqd', p, v)
    ctx = jnp.transpose(ctx, (0, 2, 1, 3)).reshape(B, S, D)
    attn = jnp.einsum('bsd,de->bse', ctx, wo) + bo

    def ln(t, g, b):
        mu = jnp.mean(t, axis=-1, keepdims=True)
        var = jnp.mean(jnp.square(t - mu), axis=-1, keepdims=True)
        return (t - mu) / jnp.sqrt(var + 1e-5) * g + b

    x1 = ln(x + attn, g1, be1)
    f = jnp.maximum(jnp.einsum('bsd,df->bsf', x1, w1) + b1, 0.0)
    f = jnp.einsum('bsf,fd->bsd', f, w2) + b2
    x2 = ln(x1 + f, g2, be2)
    return x2 * mask[:, :, None].astype(x2.dtype)


# --------------------------------------------------------------------------
if __name__ == "__main__":
    B, S = 2, 8                   # batch, sequence length
    D, H, FFN = 32, 2, 64         # embedding_size, n_heads, ffn_size

    key = jax.random.PRNGKey(0)
    k_x, k_p = jax.random.split(key)

    tensor = jax.random.normal(k_x, (B, S, D), jnp.float32)
    mask = jnp.ones((B, S), jnp.int32)
    mask = mask.at[1, 6:].set(0)  # a couple of padded positions in batch element 1

    params = init_params(k_p, D, FFN)

    out = transformer_encoder_layer(tensor, mask, params, n_heads=H)
    out = jax.block_until_ready(out)

    assert out.shape == (B, S, D) and out.dtype == jnp.float32
    assert bool(jnp.all(jnp.isfinite(out)))

    ref = reference_forward(tensor, mask, params, n_heads=H)
    max_err = float(jnp.max(jnp.abs(out - ref)))
    assert max_err < 1e-2, f"mismatch vs reference: {max_err}"
    # padded positions are exactly zeroed by the final mask multiply
    assert bool(jnp.all(out[1, 6:] == 0.0))

    print("KERNEL_OK")
</pallas_src>

<mosaic_0001>
module attributes {stable_mosaic.version = 11 : i64} {
  func.func @_encoder_layer_kernel(%arg0: memref<16x32xf32, #tpu.memory_space<vmem>>, %arg1: memref<2x1x8xf32, #tpu.memory_space<vmem>>, %arg2: memref<16x1xf32, #tpu.memory_space<vmem>>, %arg3: memref<32x96xf32, #tpu.memory_space<vmem>>, %arg4: memref<1x96xf32, #tpu.memory_space<vmem>>, %arg5: memref<32x32xf32, #tpu.memory_space<vmem>>, %arg6: memref<1x32xf32, #tpu.memory_space<vmem>>, %arg7: memref<1x32xf32, #tpu.memory_space<vmem>>, %arg8: memref<1x32xf32, #tpu.memory_space<vmem>>, %arg9: memref<32x64xf32, #tpu.memory_space<vmem>>, %arg10: memref<1x64xf32, #tpu.memory_space<vmem>>, %arg11: memref<64x32xf32, #tpu.memory_space<vmem>>, %arg12: memref<1x32xf32, #tpu.memory_space<vmem>>, %arg13: memref<1x32xf32, #tpu.memory_space<vmem>>, %arg14: memref<1x32xf32, #tpu.memory_space<vmem>>, %arg15: memref<16x32xf32, #tpu.memory_space<vmem>>) attributes {dimension_semantics = [], scalar_prefetch = 0 : i64, scratch_operands = 0 : i64, tpu.core_type = #tpu.core_type<tc>} {
    %c0 = arith.constant 0 : index
    %c0_0 = arith.constant 0 : index
    %0 = vector.load %arg0[%c0, %c0_0] : memref<16x32xf32, #tpu.memory_space<vmem>>, vector<16x32xf32>
    %c0_1 = arith.constant 0 : index
    %c0_2 = arith.constant 0 : index
    %1 = vector.load %arg3[%c0_1, %c0_2] : memref<32x96xf32, #tpu.memory_space<vmem>>, vector<32x96xf32>
    %cst = arith.constant dense<0.000000e+00> : vector<16x96xf32>
    %2 = tpu.matmul %0, %1, %cst {dimension_numbers = #tpu.dot_dimension_numbers<[1], [0], [0], [1], [0, 0, 1, 1], [], []>} : vector<16x32xf32>, vector<32x96xf32>, vector<16x96xf32> -> vector<16x96xf32>
    %c0_3 = arith.constant 0 : index
    %c0_4 = arith.constant 0 : index
    %3 = vector.load %arg4[%c0_3, %c0_4] : memref<1x96xf32, #tpu.memory_space<vmem>>, vector<1x96xf32>
    %4 = vector.broadcast %3 : vector<1x96xf32> to vector<16x96xf32>
    %5 = arith.addf %2, %4 : vector<16x96xf32>
    %c0_5 = arith.constant 0 : index
    %c0_6 = arith.constant 0 : index
    %c0_7 = arith.constant 0 : index
    %6 = vector.load %arg1[%c0_5, %c0_6, %c0_7] : memref<2x1x8xf32, #tpu.memory_space<vmem>>, vector<2x1x8xf32>
    %7 = vector.extract_strided_slice %5 {offsets = [0, 0], sizes = [16, 16], strides = [1, 1]} : vector<16x96xf32> to vector<16x16xf32>
    %8 = vector.shape_cast %7 : vector<16x16xf32> to vector<2x8x16xf32>
    %cst_8 = arith.constant 2.500000e-01 : f32
    %9 = vector.broadcast %cst_8 : f32 to vector<2x8x16xf32>
    %10 = arith.mulf %8, %9 : vector<2x8x16xf32>
    %11 = vector.extract_strided_slice %5 {offsets = [0, 32], sizes = [16, 16], strides = [1, 1]} : vector<16x96xf32> to vector<16x16xf32>
    %12 = vector.shape_cast %11 : vector<16x16xf32> to vector<2x8x16xf32>
    %13 = vector.extract_strided_slice %5 {offsets = [0, 64], sizes = [16, 16], strides = [1, 1]} : vector<16x96xf32> to vector<16x16xf32>
    %14 = vector.shape_cast %13 : vector<16x16xf32> to vector<2x8x16xf32>
    %cst_9 = arith.constant dense<0.000000e+00> : vector<2x8x8xf32>
    %15 = tpu.matmul %10, %12, %cst_9 {dimension_numbers = #tpu.dot_dimension_numbers<[2], [2], [1], [1], [0, 0, 0, 1, 1, 1], [0], [0]>} : vector<2x8x16xf32>, vector<2x8x16xf32>, vector<2x8x8xf32> -> vector<2x8x8xf32>
    %16 = vector.broadcast %6 : vector<2x1x8xf32> to vector<2x8x8xf32>
    %17 = arith.addf %15, %16 : vector<2x8x8xf32>
    %cst_10 = arith.constant dense<0xFF800000> : vector<2x8xf32>
    %18 = vector.multi_reduction <maximumf>, %17, %cst_10 [2] : vector<2x8x8xf32> to vector<2x8xf32>
    %19 = vector.shape_cast %18 : vector<2x8xf32> to vector<2x8x1xf32>
    %20 = vector.broadcast %19 : vector<2x8x1xf32> to vector<2x8x8xf32>
    %21 = arith.subf %17, %20 : vector<2x8x8xf32>
    %22 = math.exp %21 : vector<2x8x8xf32>
    %cst_11 = arith.constant dense<0.000000e+00> : vector<2x8xf32>
    %23 = vector.multi_reduction <add>, %22, %cst_11 [2] : vector<2x8x8xf32> to vector<2x8xf32>
    %24 = vector.shape_cast %23 : vector<2x8xf32> to vector<2x8x1xf32>
    %25 = tpu.reciprocal %24 {approx = true} : vector<2x8x1xf32> -> vector<2x8x1xf32>
    %26 = vector.broadcast %25 : vector<2x8x1xf32> to vector<2x8x8xf32>
    %27 = arith.mulf %22, %26 : vector<2x8x8xf32>
    %cst_12 = arith.constant dense<0.000000e+00> : vector<2x8x16xf32>
    %28 = tpu.matmul %27, %14, %cst_12 {dimension_numbers = #tpu.dot_dimension_numbers<[2], [1], [1], [2], [0, 0, 0, 1, 1, 2], [0], [0]>} : vector<2x8x8xf32>, vector<2x8x16xf32>, vector<2x8x16xf32> -> vector<2x8x16xf32>
    %29 = vector.shape_cast %28 : vector<2x8x16xf32> to vector<16x16xf32>
    %30 = vector.extract_strided_slice %5 {offsets = [0, 16], sizes = [16, 16], strides = [1, 1]} : vector<16x96xf32> to vector<16x16xf32>
    %31 = vector.shape_cast %30 : vector<16x16xf32> to vector<2x8x16xf32>
    %cst_13 = arith.constant 2.500000e-01 : f32
    %32 = vector.broadcast %cst_13 : f32 to vector<2x8x16xf32>
    %33 = arith.mulf %31, %32 : vector<2x8x16xf32>
    %34 = vector.extract_strided_slice %5 {offsets = [0, 48], sizes = [16, 16], strides = [1, 1]} : vector<16x96xf32> to vector<16x16xf32>
    %35 = vector.shape_cast %34 : vector<16x16xf32> to vector<2x8x16xf32>
    %36 = vector.extract_strided_slice %5 {offsets = [0, 80], sizes = [16, 16], strides = [1, 1]} : vector<16x96xf32> to vector<16x16xf32>
    %37 = vector.shape_cast %36 : vector<16x16xf32> to vector<2x8x16xf32>
    %cst_14 = arith.constant dense<0.000000e+00> : vector<2x8x8xf32>
    %38 = tpu.matmul %33, %35, %cst_14 {dimension_numbers = #tpu.dot_dimension_numbers<[2], [2], [1], [1], [0, 0, 0, 1, 1, 1], [0], [0]>} : vector<2x8x16xf32>, vector<2x8x16xf32>, vector<2x8x8xf32> -> vector<2x8x8xf32>
    %39 = vector.broadcast %6 : vector<2x1x8xf32> to vector<2x8x8xf32>
    %40 = arith.addf %38, %39 : vector<2x8x8xf32>
    %cst_15 = arith.constant dense<0xFF800000> : vector<2x8xf32>
    %41 = vector.multi_reduction <maximumf>, %40, %cst_15 [2] : vector<2x8x8xf32> to vector<2x8xf32>
    %42 = vector.shape_cast %41 : vector<2x8xf32> to vector<2x8x1xf32>
    %43 = vector.broadcast %42 : vector<2x8x1xf32> to vector<2x8x8xf32>
    %44 = arith.subf %40, %43 : vector<2x8x8xf32>
    %45 = math.exp %44 : vector<2x8x8xf32>
    %cst_16 = arith.constant dense<0.000000e+00> : vector<2x8xf32>
    %46 = vector.multi_reduction <add>, %45, %cst_16 [2] : vector<2x8x8xf32> to vector<2x8xf32>
    %47 = vector.shape_cast %46 : vector<2x8xf32> to vector<2x8x1xf32>
    %48 = tpu.reciprocal %47 {approx = true} : vector<2x8x1xf32> -> vector<2x8x1xf32>
    %49 = vector.broadcast %48 : vector<2x8x1xf32> to vector<2x8x8xf32>
    %50 = arith.mulf %45, %49 : vector<2x8x8xf32>
    %cst_17 = arith.constant dense<0.000000e+00> : vector<2x8x16xf32>
    %51 = tpu.matmul %50, %37, %cst_17 {dimension_numbers = #tpu.dot_dimension_numbers<[2], [1], [1], [2], [0, 0, 0, 1, 1, 2], [0], [0]>} : vector<2x8x8xf32>, vector<2x8x16xf32>, vector<2x8x16xf32> -> vector<2x8x16xf32>
    %52 = vector.shape_cast %51 : vector<2x8x16xf32> to vector<16x16xf32>
    %53 = tpu.concatenate %29, %52 in 1 : vector<16x16xf32>, vector<16x16xf32> -> vector<16x32xf32>
    %c0_18 = arith.constant 0 : index
    %c0_19 = arith.constant 0 : index
    %54 = vector.load %arg5[%c0_18, %c0_19] : memref<32x32xf32, #tpu.memory_space<vmem>>, vector<32x32xf32>
    %cst_20 = arith.constant dense<0.000000e+00> : vector<16x32xf32>
    %55 = tpu.matmul %53, %54, %cst_20 {dimension_numbers = #tpu.dot_dimension_numbers<[1], [0], [0], [1], [0, 0, 1, 1], [], []>} : vector<16x32xf32>, vector<32x32xf32>, vector<16x32xf32> -> vector<16x32xf32>
    %c0_21 = arith.constant 0 : index
    %c0_22 = arith.constant 0 : index
    %56 = vector.load %arg6[%c0_21, %c0_22] : memref<1x32xf32, #tpu.memory_space<vmem>>, vector<1x32xf32>
    %57 = vector.broadcast %56 : vector<1x32xf32> to vector<16x32xf32>
    %58 = arith.addf %55, %57 : vector<16x32xf32>
    %59 = arith.addf %0, %58 : vector<16x32xf32>
    %c0_23 = arith.constant 0 : index
    %c0_24 = arith.constant 0 : index
    %60 = vector.load %arg7[%c0_23, %c0_24] : memref<1x32xf32, #tpu.memory_space<vmem>>, vector<1x32xf32>
    %c0_25 = arith.constant 0 : index
    %c0_26 = arith.constant 0 : index
    %61 = vector.load %arg8[%c0_25, %c0_26] : memref<1x32xf32, #tpu.memory_space<vmem>>, vector<1x32xf32>
    %cst_27 = arith.constant dense<0.000000e+00> : vector<16xf32>
    %62 = vector.multi_reduction <add>, %59, %cst_27 [1] : vector<16x32xf32> to vector<16xf32>
    %63 = vector.shape_cast %62 : vector<16xf32> to vector<16x1xf32>
    %cst_28 = arith.constant 3.200000e+01 : f32
    %64 = vector.broadcast %cst_28 : f32 to vector<16x1xf32>
    %65 = arith.divf %63, %64 : vector<16x1xf32>
    %66 = vector.broadcast %65 : vector<16x1xf32> to vector<16x32xf32>
    %67 = arith.subf %59, %66 : vector<16x32xf32>
    %68 = arith.mulf %67, %67 : vector<16x32xf32>
    %cst_29 = arith.constant dense<0.000000e+00> : vector<16xf32>
    %69 = vector.multi_reduction <add>, %68, %cst_29 [1] : vector<16x32xf32> to vector<16xf32>
    %70 = vector.shape_cast %69 : vector<16xf32> to vector<16x1xf32>
    %cst_30 = arith.constant 3.200000e+01 : f32
    %71 = vector.broadcast %cst_30 : f32 to vector<16x1xf32>
    %72 = arith.divf %70, %71 : vector<16x1xf32>
    %73 = vector.broadcast %65 : vector<16x1xf32> to vector<16x32xf32>
    %74 = arith.subf %59, %73 : vector<16x32xf32>
    %cst_31 = arith.constant 9.99999974E-6 : f32
    %75 = vector.broadcast %cst_31 : f32 to vector<16x1xf32>
    %76 = arith.addf %72, %75 : vector<16x1xf32>
    %77 = math.rsqrt %76 : vector<16x1xf32>
    %78 = vector.broadcast %77 : vector<16x1xf32> to vector<16x32xf32>
    %79 = arith.mulf %74, %78 : vector<16x32xf32>
    %80 = vector.broadcast %60 : vector<1x32xf32> to vector<16x32xf32>
    %81 = arith.mulf %79, %80 : vector<16x32xf32>
    %82 = vector.broadcast %61 : vector<1x32xf32> to vector<16x32xf32>
    %83 = arith.addf %81, %82 : vector<16x32xf32>
    %c0_32 = arith.constant 0 : index
    %c0_33 = arith.constant 0 : index
    %84 = vector.load %arg9[%c0_32, %c0_33] : memref<32x64xf32, #tpu.memory_space<vmem>>, vector<32x64xf32>
    %cst_34 = arith.constant dense<0.000000e+00> : vector<16x64xf32>
    %85 = tpu.matmul %83, %84, %cst_34 {dimension_numbers = #tpu.dot_dimension_numbers<[1], [0], [0], [1], [0, 0, 1, 1], [], []>} : vector<16x32xf32>, vector<32x64xf32>, vector<16x64xf32> -> vector<16x64xf32>
    %c0_35 = arith.constant 0 : index
    %c0_36 = arith.constant 0 : index
    %86 = vector.load %arg10[%c0_35, %c0_36] : memref<1x64xf32, #tpu.memory_space<vmem>>, vector<1x64xf32>
    %87 = vector.broadcast %86 : vector<1x64xf32> to vector<16x64xf32>
    %88 = arith.addf %85, %87 : vector<16x64xf32>
    %cst_37 = arith.constant 0.000000e+00 : f32
    %89 = vector.broadcast %cst_37 : f32 to vector<16x64xf32>
    %90 = arith.maximumf %88, %89 : vector<16x64xf32>
    %c0_38 = arith.constant 0 : index
    %c0_39 = arith.constant 0 : index
    %91 = vector.load %arg11[%c0_38, %c0_39] : memref<64x32xf32, #tpu.memory_space<vmem>>, vector<64x32xf32>
    %cst_40 = arith.constant dense<0.000000e+00> : vector<16x32xf32>
    %92 = tpu.matmul %90, %91, %cst_40 {dimension_numbers = #tpu.dot_dimension_numbers<[1], [0], [0], [1], [0, 0, 1, 1], [], []>} : vector<16x64xf32>, vector<64x32xf32>, vector<16x32xf32> -> vector<16x32xf32>
    %c0_41 = arith.constant 0 : index
    %c0_42 = arith.constant 0 : index
    %93 = vector.load %arg12[%c0_41, %c0_42] : memref<1x32xf32, #tpu.memory_space<vmem>>, vector<1x32xf32>
    %94 = vector.broadcast %93 : vector<1x32xf32> to vector<16x32xf32>
    %95 = arith.addf %92, %94 : vector<16x32xf32>
    %96 = arith.addf %83, %95 : vector<16x32xf32>
    %c0_43 = arith.constant 0 : index
    %c0_44 = arith.constant 0 : index
    %97 = vector.load %arg13[%c0_43, %c0_44] : memref<1x32xf32, #tpu.memory_space<vmem>>, vector<1x32xf32>
    %c0_45 = arith.constant 0 : index
    %c0_46 = arith.constant 0 : index
    %98 = vector.load %arg14[%c0_45, %c0_46] : memref<1x32xf32, #tpu.memory_space<vmem>>, vector<1x32xf32>
    %cst_47 = arith.constant dense<0.000000e+00> : vector<16xf32>
    %99 = vector.multi_reduction <add>, %96, %cst_47 [1] : vector<16x32xf32> to vector<16xf32>
    %100 = vector.shape_cast %99 : vector<16xf32> to vector<16x1xf32>
    %cst_48 = arith.constant 3.200000e+01 : f32
    %101 = vector.broadcast %cst_48 : f32 to vector<16x1xf32>
    %102 = arith.divf %100, %101 : vector<16x1xf32>
    %103 = vector.broadcast %102 : vector<16x1xf32> to vector<16x32xf32>
    %104 = arith.subf %96, %103 : vector<16x32xf32>
    %105 = arith.mulf %104, %104 : vector<16x32xf32>
    %cst_49 = arith.constant dense<0.000000e+00> : vector<16xf32>
    %106 = vector.multi_reduction <add>, %105, %cst_49 [1] : vector<16x32xf32> to vector<16xf32>
    %107 = vector.shape_cast %106 : vector<16xf32> to vector<16x1xf32>
    %cst_50 = arith.constant 3.200000e+01 : f32
    %108 = vector.broadcast %cst_50 : f32 to vector<16x1xf32>
    %109 = arith.divf %107, %108 : vector<16x1xf32>
    %110 = vector.broadcast %102 : vector<16x1xf32> to vector<16x32xf32>
    %111 = arith.subf %96, %110 : vector<16x32xf32>
    %cst_51 = arith.constant 9.99999974E-6 : f32
    %112 = vector.broadcast %cst_51 : f32 to vector<16x1xf32>
    %113 = arith.addf %109, %112 : vector<16x1xf32>
    %114 = math.rsqrt %113 : vector<16x1xf32>
    %115 = vector.broadcast %114 : vector<16x1xf32> to vector<16x32xf32>
    %116 = arith.mulf %111, %115 : vector<16x32xf32>
    %117 = vector.broadcast %97 : vector<1x32xf32> to vector<16x32xf32>
    %118 = arith.mulf %116, %117 : vector<16x32xf32>
    %119 = vector.broadcast %98 : vector<1x32xf32> to vector<16x32xf32>
    %120 = arith.addf %118, %119 : vector<16x32xf32>
    %c0_52 = arith.constant 0 : index
    %c0_53 = arith.constant 0 : index
    %121 = vector.load %arg2[%c0_52, %c0_53] : memref<16x1xf32, #tpu.memory_space<vmem>>, vector<16x1xf32>
    %122 = vector.broadcast %121 : vector<16x1xf32> to vector<16x32xf32>
    %123 = arith.mulf %120, %122 : vector<16x32xf32>
    %c0_54 = arith.constant 0 : index
    %c0_55 = arith.constant 0 : index
    %124 = vector.load %arg15[%c0_54, %c0_55] : memref<16x32xf32, #tpu.memory_space<vmem>>, vector<16x32xf32>
    tpu.vector_store %arg15[%c0_54, %c0_55], %123 {strides = array<i32>} : memref<16x32xf32, #tpu.memory_space<vmem>>, vector<16x32xf32>,
    return
  }
}

</mosaic_0001>

<llo_original>
// kernel: tpu_custom_call.1
$region0: #{tpu_custom_call.1}
  #allocation0 [shape = 'u32[]', space=smem, size = 0x4, offset = 0x4, fixed_abs, tag = 'smem constant byte address 0x4 - core index']
  #allocation1 [shape = 'u32[144,128]{1,0:T(1,128)}', space=vmem, size = 0x12000, scoped, tag = 'internal scratch']
  %s0 = inlined_call_operand.vmem [shape: f32[16,32], index: 0, kind: input, shape index: {}]
  %s1 = inlined_call_operand.vmem [shape: f32[2,1,8], index: 1, kind: input, shape index: {}]
  %s2 = inlined_call_operand.vmem [shape: f32[16,1], index: 2, kind: input, shape index: {}]
  %s3 = inlined_call_operand.vmem [shape: f32[32,96], index: 3, kind: input, shape index: {}]
  %s4 = inlined_call_operand.vmem [shape: f32[1,96], index: 4, kind: input, shape index: {}]
  %s5 = inlined_call_operand.vmem [shape: f32[32,32], index: 5, kind: input, shape index: {}]
  %s6 = inlined_call_operand.vmem [shape: f32[1,32], index: 6, kind: input, shape index: {}]
  %s7 = inlined_call_operand.vmem [shape: f32[1,32], index: 7, kind: input, shape index: {}]
  %s8 = inlined_call_operand.vmem [shape: f32[1,32], index: 8, kind: input, shape index: {}]
  %s9 = inlined_call_operand.vmem [shape: f32[32,64], index: 9, kind: input, shape index: {}]
  %s10 = inlined_call_operand.vmem [shape: f32[1,64], index: 10, kind: input, shape index: {}]
  %s11 = inlined_call_operand.vmem [shape: f32[64,32], index: 11, kind: input, shape index: {}]
  %s12 = inlined_call_operand.vmem [shape: f32[1,32], index: 12, kind: input, shape index: {}]
  %s13 = inlined_call_operand.vmem [shape: f32[1,32], index: 13, kind: input, shape index: {}]
  %s14 = inlined_call_operand.vmem [shape: f32[1,32], index: 14, kind: input, shape index: {}]
  %s15 = inlined_call_operand.hbm [shape: f32[16,32], index: 15, kind: output, shape index: {}]
  %s16 = sld [smem:[#allocation0]]
  $region70: #{tpu_custom_call.1} parent=0
    _
  %s18 = ssub.s32 1, %s16
  %s19 = scalar_select 0, %s18, %s16
  $region1: #{tpu_custom_call.1} parent=0
    #allocation2 [shape = 'u8[8192]{0}', space=vmem, size = 0x2000, scoped, tag = 'output window, operand 0, single buffered']
    #allocation3 [shape = 's32[1]{0}', space=sflag, size = 0x4, scoped, tag = 'scoped memory for tpu_custom_call.1']
    %20 = vsyncpa [#allocation3], 0
    // Predicated region
    $region2: #{tpu_custom_call.1} parent=1 // pred_check
      _
    $region3: #{tpu_custom_call.1} parent=1 // pred_check_branch
      %22 = sbr.rel (0) target = $region5
    $region4: #{tpu_custom_call.1} parent=1 // pred_region
      _
    $region5: #{tpu_custom_call.1} parent=1 // pred_fallthru
      _
    // Predicated region
    $region6: #{tpu_custom_call.1} parent=1 // pred_check
      _
    $region7: #{tpu_custom_call.1} parent=1 // pred_check_branch
      %24 = sbr.rel (0) target = $region9
    $region8: #{tpu_custom_call.1} parent=1 // pred_region
      _
    $region9: #{tpu_custom_call.1} parent=1 // pred_fallthru
      _
    // Predicated region
    $region10: #{tpu_custom_call.1} parent=1 // pred_check
      _
    $region11: #{tpu_custom_call.1} parent=1 // pred_check_branch
      %26 = sbr.rel (0) target = $region13
    $region12: #{tpu_custom_call.1} parent=1 // pred_region
      _
    $region13: #{tpu_custom_call.1} parent=1 // pred_fallthru
      _
    // Predicated region
    $region14: #{tpu_custom_call.1} parent=1 // pred_check
      _
    $region15: #{tpu_custom_call.1} parent=1 // pred_check_branch
      %28 = sbr.rel (0) target = $region17
    $region16: #{tpu_custom_call.1} parent=1 // pred_region
      _
    $region17: #{tpu_custom_call.1} parent=1 // pred_fallthru
      _
    // Predicated region
    $region18: #{tpu_custom_call.1} parent=1 // pred_check
      _
    $region19: #{tpu_custom_call.1} parent=1 // pred_check_branch
      %30 = sbr.rel (0) target = $region21
    $region20: #{tpu_custom_call.1} parent=1 // pred_region
      _
    $region21: #{tpu_custom_call.1} parent=1 // pred_fallthru
      _
    // Predicated region
    $region22: #{tpu_custom_call.1} parent=1 // pred_check
      _
    $region23: #{tpu_custom_call.1} parent=1 // pred_check_branch
      %32 = sbr.rel (0) target = $region25
    $region24: #{tpu_custom_call.1} parent=1 // pred_region
      _
    $region25: #{tpu_custom_call.1} parent=1 // pred_fallthru
      _
    // Predicated region
    $region26: #{tpu_custom_call.1} parent=1 // pred_check
      _
    $region27: #{tpu_custom_call.1} parent=1 // pred_check_branch
      %34 = sbr.rel (0) target = $region29
    $region28: #{tpu_custom_call.1} parent=1 // pred_region
      _
    $region29: #{tpu_custom_call.1} parent=1 // pred_fallthru
      _
    // Predicated region
    $region30: #{tpu_custom_call.1} parent=1 // pred_check
      _
    $region31: #{tpu_custom_call.1} parent=1 // pred_check_branch
      %36 = sbr.rel (0) target = $region33
    $region32: #{tpu_custom_call.1} parent=1 // pred_region
      _
    $region33: #{tpu_custom_call.1} parent=1 // pred_fallthru
      _
    // Predicated region
    $region34: #{tpu_custom_call.1} parent=1 // pred_check
      _
    $region35: #{tpu_custom_call.1} parent=1 // pred_check_branch
      %38 = sbr.rel (0) target = $region37
    $region36: #{tpu_custom_call.1} parent=1 // pred_region
      _
    $region37: #{tpu_custom_call.1} parent=1 // pred_fallthru
      _
    // Predicated region
    $region38: #{tpu_custom_call.1} parent=1 // pred_check
      _
    $region39: #{tpu_custom_call.1} parent=1 // pred_check_branch
      %40 = sbr.rel (0) target = $region41
    $region40: #{tpu_custom_call.1} parent=1 // pred_region
      _
    $region41: #{tpu_custom_call.1} parent=1 // pred_fallthru
      _
    // Predicated region
    $region42: #{tpu_custom_call.1} parent=1 // pred_check
      _
    $region43: #{tpu_custom_call.1} parent=1 // pred_check_branch
      %42 = sbr.rel (0) target = $region45
    $region44: #{tpu_custom_call.1} parent=1 // pred_region
      _
    $region45: #{tpu_custom_call.1} parent=1 // pred_fallthru
      _
    // Predicated region
    $region46: #{tpu_custom_call.1} parent=1 // pred_check
      _
    $region47: #{tpu_custom_call.1} parent=1 // pred_check_branch
      %44 = sbr.rel (0) target = $region49
    $region48: #{tpu_custom_call.1} parent=1 // pred_region
      _
    $region49: #{tpu_custom_call.1} parent=1 // pred_fallthru
      _
    // Predicated region
    $region50: #{tpu_custom_call.1} parent=1 // pred_check
      _
    $region51: #{tpu_custom_call.1} parent=1 // pred_check_branch
      %46 = sbr.rel (0) target = $region53
    $region52: #{tpu_custom_call.1} parent=1 // pred_region
      _
    $region53: #{tpu_custom_call.1} parent=1 // pred_fallthru
      _
    // Predicated region
    $region54: #{tpu_custom_call.1} parent=1 // pred_check
      _
    $region55: #{tpu_custom_call.1} parent=1 // pred_check_branch
      %48 = sbr.rel (0) target = $region57
    $region56: #{tpu_custom_call.1} parent=1 // pred_region
      _
    $region57: #{tpu_custom_call.1} parent=1 // pred_fallthru
      _
    // Predicated region
    $region58: #{tpu_custom_call.1} parent=1 // pred_check
      _
    $region59: #{tpu_custom_call.1} parent=1 // pred_check_branch
      %50 = sbr.rel (0) target = $region61
    $region60: #{tpu_custom_call.1} parent=1 // pred_region
      _
    $region61: #{tpu_custom_call.1} parent=1 // pred_fallthru
      _
    %v51 = vld [vmem:[%s0] sm:$0xff]
    %v52 = vld [vmem:[%s0 + $0x8] sm:$0xff]
    %v53 = vld [vmem:[%s3] sm:$0xff]
    %v54 = vld [vmem:[%s3 + $0x8] sm:$0xff]
    %v55 = vld [vmem:[%s3 + $0x10] sm:$0xff]
    %v56 = vld [vmem:[%s3 + $0x18] sm:$0xff]
    %v57 = vld [vmem:[%s4] sm:$0x1]
    %v59 = vlaneseq
    %v60 = vshrl.u32 %v59, 7
    %v61 = vsub.s32 0, %v60
    %v62 = vrot.slane %v57, %v61
    %vm64 = vcmask 261120
    %v66 = vsel %vm64, %v51, 0
    %v69 = vsel %vm64, %v52, 0
    %71 = vmatprep.subr.mxu0 0.0
    %72 = vmatpush1.msra.mxu0 %v53
    %73 = vmatprep.subr.mxu0 0.0
    %74 = vmatpush1.msra.mxu0 %v54
    %75 = vmatprep.subr.mxu0 0.0
    %76 = vmatpush1.msra.mxu0 %v55
    %77 = vmatprep.subr.mxu0 0.0
    %78 = vmatpush1.msra.mxu0 %v56
    %79 = vmatprep.subr.mxu0 0.0
    %80 = vmatpush1.msra.mxu0 0.0
    %81 = vmatprep.subr.mxu0 0.0
    %82 = vmatpush1.msra.mxu0 0.0
    %83 = vmatprep.subr.mxu0 0.0
    %84 = vmatpush1.msra.mxu0 0.0
    %85 = vmatprep.subr.mxu0 0.0
    %86 = vmatpush1.msra.mxu0 0.0
    %87 = vmatprep.subr.mxu0 0.0
    %88 = vmatpush1.msra.mxu0 0.0
    %89 = vmatprep.subr.mxu0 0.0
    %90 = vmatpush1.msra.mxu0 0.0
    %91 = vmatprep.subr.mxu0 0.0
    %92 = vmatpush1.msra.mxu0 0.0
    %93 = vmatprep.subr.mxu0 0.0
    %94 = vmatpush1.msra.mxu0 0.0
    %95 = vmatprep.subr.mxu0 0.0
    %96 = vmatpush1.msra.mxu0 0.0
    %97 = vmatprep.subr.mxu0 0.0
    %98 = vmatpush1.msra.mxu0 0.0
    %99 = vmatprep.subr.mxu0 0.0
    %100 = vmatpush1.msra.mxu0 0.0
    %101 = vmatprep.subr.mxu0 0.0
    %102 = vmatpush1.msra.mxu0 0.0
    %103 = vmatprep.subr.mxu0 0.0
    %104 = vmatpush1.msra.mxu0 0.0
    %105 = vmatprep.subr.mxu0 0.0
    %106 = vmatpush1.msra.mxu0 0.0
    %107 = vmatprep.subr.mxu0 0.0
    %108 = vmatpush1.msra.mxu0 0.0
    %109 = vmatprep.subr.mxu0 0.0
    %110 = vmatpush1.msra.mxu0 0.0
    %111 = vmatprep.subr.mxu0 0.0
    %112 = vmatpush1.msra.mxu0 0.0
    %113 = vmatprep.subr.mxu0 0.0
    %114 = vmatpush1.msra.mxu0 0.0
    %115 = vmatprep.subr.mxu0 0.0
    %116 = vmatpush1.msra.mxu0 0.0
    %117 = vmatprep.subr.mxu0 0.0
    %118 = vmatpush1.msra.mxu0 0.0
    %119 = vmatprep.subr.mxu0 0.0
    %120 = vmatpush1.msra.mxu0 0.0
    %121 = vmatprep.subr.mxu0 0.0
    %122 = vmatpush1.msra.mxu0 0.0
    %123 = vmatprep.subr.mxu0 0.0
    %124 = vmatpush1.msra.mxu0 0.0
    %125 = vmatprep.subr.mxu0 0.0
    %126 = vmatpush1.msra.mxu0 0.0
    %127 = vmatprep.subr.mxu0 0.0
    %128 = vmatpush1.msra.mxu0 0.0
    %129 = vmatprep.subr.mxu0 0.0
    %130 = vmatpush1.msra.mxu0 0.0
    %131 = vmatprep.subr.mxu0 0.0
    %132 = vmatpush1.msra.mxu0 0.0
    %133 = vmatprep.subr.mxu0 0.0
    %134 = vmatpush1.msra.mxu0 0.0
    %135 = vmatprep.mubr.f32.mxu0 0.0
    %136 = vmatmul.mubr.f32.gmra.mrb[0].mxu0 %v66
    %v137 = vpop.f32.mrb[0].mxu0
    %v138 = vadd.f32 %v62, %v137
    %v139 = vpop.f32.mrb[0].mxu0
    %140 = vmatprep.mubr.f32.mxu0 0.0
    %141 = vmatmul.mubr.f32.gmra.mrb[0].mxu0 %v69
    %v142 = vpop.f32.mrb[0].mxu0
    %v143 = vadd.f32 %v62, %v142
    %v144 = vpop.f32.mrb[0].mxu0
    %145 = vdwg.mxu0
    %v146 = vld [vmem:[%s1] sm:$0x1]
    %v147 = vld [vmem:[%s1 + $0x1] sm:$0x1]
    %v148 = vmul.f32 %v138, 0.25
    %v149 = vmul.f32 %v143, 0.25
    %v152 = vlaneseq
    %v153 = vshrl.u32 %v152, 7
    %v154 = vsub.s32 0, %v153
    %v155 = vrot.slane %v146, %v154
    %v156 = vlaneseq
    %v157 = vshrl.u32 %v156, 7
    %v158 = vsub.s32 0, %v157
    %v159 = vrot.slane %v147, %v158
    %163 = vrot.lane.b32.xlu0 %v138, 96
    %v164 = vpop.permute.xlu0 %163
    %vm165 = vcmask 130048
    %v167 = vsel %vm165, %v148, 0
    %v169 = vsel %vm165, %v164, 0
    %171 = vmatprep.subr.mxu0 0.0
    %172 = vmatpush1.xpose.msra.mxu0 %v169
    %173 = vmatprep.subr.mxu0 0.0
    %174 = vmatpush1.xpose.msra.mxu0 0.0
    %175 = vmatprep.subr.mxu0 0.0
    %176 = vmatpush1.xpose.msra.mxu0 0.0
    %177 = vmatprep.subr.mxu0 0.0
    %178 = vmatpush1.xpose.msra.mxu0 0.0
    %179 = vmatprep.subr.mxu0 0.0
    %180 = vmatpush1.xpose.msra.mxu0 0.0
    %181 = vmatprep.subr.mxu0 0.0
    %182 = vmatpush1.xpose.msra.mxu0 0.0
    %183 = vmatprep.subr.mxu0 0.0
    %184 = vmatpush1.xpose.msra.mxu0 0.0
    %185 = vmatprep.subr.mxu0 0.0
    %186 = vmatpush1.xpose.msra.mxu0 0.0
    %187 = vmatprep.subr.mxu0 0.0
    %188 = vmatpush1.xpose.msra.mxu0 0.0
    %189 = vmatprep.subr.mxu0 0.0
    %190 = vmatpush1.xpose.msra.mxu0 0.0
    %191 = vmatprep.subr.mxu0 0.0
    %192 = vmatpush1.xpose.msra.mxu0 0.0
    %193 = vmatprep.subr.mxu0 0.0
    %194 = vmatpush1.xpose.msra.mxu0 0.0
    %195 = vmatprep.subr.mxu0 0.0
    %196 = vmatpush1.xpose.msra.mxu0 0.0
    %197 = vmatprep.subr.mxu0 0.0
    %198 = vmatpush1.xpose.msra.mxu0 0.0
    %199 = vmatprep.subr.mxu0 0.0
    %200 = vmatpush1.xpose.msra.mxu0 0.0
    %201 = vmatprep.subr.mxu0 0.0
    %202 = vmatpush1.xpose.msra.mxu0 0.0
    %203 = vmatprep.subr.mxu0 0.0
    %204 = vmatpush1.xpose.msra.mxu0 0.0
    %205 = vmatprep.subr.mxu0 0.0
    %206 = vmatpush1.xpose.msra.mxu0 0.0
    %207 = vmatprep.subr.mxu0 0.0
    %208 = vmatpush1.xpose.msra.mxu0 0.0
    %209 = vmatprep.subr.mxu0 0.0
    %210 = vmatpush1.xpose.msra.mxu0 0.0
    %211 = vmatprep.subr.mxu0 0.0
    %212 = vmatpush1.xpose.msra.mxu0 0.0
    %213 = vmatprep.subr.mxu0 0.0
    %214 = vmatpush1.xpose.msra.mxu0 0.0
    %215 = vmatprep.subr.mxu0 0.0
    %216 = vmatpush1.xpose.msra.mxu0 0.0
    %217 = vmatprep.subr.mxu0 0.0
    %218 = vmatpush1.xpose.msra.mxu0 0.0
    %219 = vmatprep.subr.mxu0 0.0
    %220 = vmatpush1.xpose.msra.mxu0 0.0
    %221 = vmatprep.subr.mxu0 0.0
    %222 = vmatpush1.xpose.msra.mxu0 0.0
    %223 = vmatprep.subr.mxu0 0.0
    %224 = vmatpush1.xpose.msra.mxu0 0.0
    %225 = vmatprep.subr.mxu0 0.0
    %226 = vmatpush1.xpose.msra.mxu0 0.0
    %227 = vmatprep.subr.mxu0 0.0
    %228 = vmatpush1.xpose.msra.mxu0 0.0
    %229 = vmatprep.subr.mxu0 0.0
    %230 = vmatpush1.xpose.msra.mxu0 0.0
    %231 = vmatprep.subr.mxu0 0.0
    %232 = vmatpush1.xpose.msra.mxu0 0.0
    %233 = vmatprep.subr.mxu0 0.0
    %234 = vmatpush1.xpose.msra.mxu0 0.0
    %235 = vmatprep.mubr.f32.mxu0 0.0
    %236 = vmatmul.mubr.f32.gmra.mrb[0].mxu0 %v167
    %v237 = vpop.f32.mrb[0].mxu0
    %v238 = vadd.f32 %v155, %v237
    %v239 = vpop.f32.mrb[0].mxu0
    %240 = vdwg.mxu0
    %242 = vrot.lane.b32.xlu0 %v143, 96
    %v243 = vpop.permute.xlu0 %242
    %v245 = vsel %vm165, %v149, 0
    %v247 = vsel %vm165, %v243, 0
    %249 = vmatprep.subr.mxu0 0.0
    %250 = vmatpush1.xpose.msra.mxu0 %v247
    %251 = vmatprep.subr.mxu0 0.0
    %252 = vmatpush1.xpose.msra.mxu0 0.0
    %253 = vmatprep.subr.mxu0 0.0
    %254 = vmatpush1.xpose.msra.mxu0 0.0
    %255 = vmatprep.subr.mxu0 0.0
    %256 = vmatpush1.xpose.msra.mxu0 0.0
    %257 = vmatprep.subr.mxu0 0.0
    %258 = vmatpush1.xpose.msra.mxu0 0.0
    %259 = vmatprep.subr.mxu0 0.0
    %260 = vmatpush1.xpose.msra.mxu0 0.0
    %261 = vmatprep.subr.mxu0 0.0
    %262 = vmatpush1.xpose.msra.mxu0 0.0
    %263 = vmatprep.subr.mxu0 0.0
    %264 = vmatpush1.xpose.msra.mxu0 0.0
    %265 = vmatprep.subr.mxu0 0.0
    %266 = vmatpush1.xpose.msra.mxu0 0.0
    %267 = vmatprep.subr.mxu0 0.0
    %268 = vmatpush1.xpose.msra.mxu0 0.0
    %269 = vmatprep.subr.mxu0 0.0
    %270 = vmatpush1.xpose.msra.mxu0 0.0
    %271 = vmatprep.subr.mxu0 0.0
    %272 = vmatpush1.xpose.msra.mxu0 0.0
    %273 = vmatprep.subr.mxu0 0.0
    %274 = vmatpush1.xpose.msra.mxu0 0.0
    %275 = vmatprep.subr.mxu0 0.0
    %276 = vmatpush1.xpose.msra.mxu0 0.0
    %277 = vmatprep.subr.mxu0 0.0
    %278 = vmatpush1.xpose.msra.mxu0 0.0
    %279 = vmatprep.subr.mxu0 0.0
    %280 = vmatpush1.xpose.msra.mxu0 0.0
    %281 = vmatprep.subr.mxu0 0.0
    %282 = vmatpush1.xpose.msra.mxu0 0.0
    %283 = vmatprep.subr.mxu0 0.0
    %284 = vmatpush1.xpose.msra.mxu0 0.0
    %285 = vmatprep.subr.mxu0 0.0
    %286 = vmatpush1.xpose.msra.mxu0 0.0
    %287 = vmatprep.subr.mxu0 0.0
    %288 = vmatpush1.xpose.msra.mxu0 0.0
    %289 = vmatprep.subr.mxu0 0.0
    %290 = vmatpush1.xpose.msra.mxu0 0.0
    %291 = vmatprep.subr.mxu0 0.0
    %292 = vmatpush1.xpose.msra.mxu0 0.0
    %293 = vmatprep.subr.mxu0 0.0
    %294 = vmatpush1.xpose.msra.mxu0 0.0
    %295 = vmatprep.subr.mxu0 0.0
    %296 = vmatpush1.xpose.msra.mxu0 0.0
    %297 = vmatprep.subr.mxu0 0.0
    %298 = vmatpush1.xpose.msra.mxu0 0.0
    %299 = vmatprep.subr.mxu0 0.0
    %300 = vmatpush1.xpose.msra.mxu0 0.0
    %301 = vmatprep.subr.mxu0 0.0
    %302 = vmatpush1.xpose.msra.mxu0 0.0
    %303 = vmatprep.subr.mxu0 0.0
    %304 = vmatpush1.xpose.msra.mxu0 0.0
    %305 = vmatprep.subr.mxu0 0.0
    %306 = vmatpush1.xpose.msra.mxu0 0.0
    %307 = vmatprep.subr.mxu0 0.0
    %308 = vmatpush1.xpose.msra.mxu0 0.0
    %309 = vmatprep.subr.mxu0 0.0
    %310 = vmatpush1.xpose.msra.mxu0 0.0
    %311 = vmatprep.subr.mxu0 0.0
    %312 = vmatpush1.xpose.msra.mxu0 0.0
    %313 = vmatprep.mubr.f32.mxu0 0.0
    %314 = vmatmul.mubr.f32.gmra.mrb[0].mxu0 %v245
    %v315 = vpop.f32.mrb[0].mxu0
    %v316 = vadd.f32 %v159, %v315
    %v317 = vpop.f32.mrb[0].mxu0
    %318 = vdwg.mxu0
    %vm319 = vcmask 64512
    %v320 = vsel %vm319, %v238, -inf
    %321 = vmax.xlane.f32.xlu0 %v320
    %v322 = vpop.xlane.xlu0 %321
    %v323 = vsel %vm319, %v316, -inf
    %324 = vmax.xlane.f32.xlu0 %v323
    %v325 = vpop.xlane.xlu0 %324
    %v326 = vsub.f32 %v238, %v322
    %v327 = vsub.f32 %v316, %v325
    %v328 = vmul.f32 %v326, 1.442695
    %v329 = vpow.pop %v328
    %v330 = vmul.f32 %v327, 1.442695
    %v331 = vpow.pop %v330
    %v332 = vsel %vm319, %v329, 0.0
    %333 = vadd.xlane.f32.xlu0 %v332
    %v334 = vpop.xlane.xlu0 %333
    %v335 = vsel %vm319, %v331, 0.0
    %336 = vadd.xlane.f32.xlu0 %v335
    %v337 = vpop.xlane.xlu0 %336
    %v338 = vrcp.pop %v334
    %v339 = vrcp.pop %v337
    %v340 = vmul.f32 %v329, %v338
    %v341 = vmul.f32 %v331, %v339
    %342 = vrot.lane.b32.xlu0 %v138, 64
    %v343 = vpop.permute.xlu0 %342
    %v346 = vsel %vm319, %v340, 0
    %348 = vmatprep.subr.mxu0 0.0
    %349 = vmatpush1.msra.mxu0 %v343
    %350 = vmatprep.subr.mxu0 0.0
    %351 = vmatpush1.msra.mxu0 0.0
    %352 = vmatprep.subr.mxu0 0.0
    %353 = vmatpush1.msra.mxu0 0.0
    %354 = vmatprep.subr.mxu0 0.0
    %355 = vmatpush1.msra.mxu0 0.0
    %356 = vmatprep.subr.mxu0 0.0
    %357 = vmatpush1.msra.mxu0 0.0
    %358 = vmatprep.subr.mxu0 0.0
    %359 = vmatpush1.msra.mxu0 0.0
    %360 = vmatprep.subr.mxu0 0.0
    %361 = vmatpush1.msra.mxu0 0.0
    %362 = vmatprep.subr.mxu0 0.0
    %363 = vmatpush1.msra.mxu0 0.0
    %364 = vmatprep.subr.mxu0 0.0
    %365 = vmatpush1.msra.mxu0 0.0
    %366 = vmatprep.subr.mxu0 0.0
    %367 = vmatpush1.msra.mxu0 0.0
    %368 = vmatprep.subr.mxu0 0.0
    %369 = vmatpush1.msra.mxu0 0.0
    %370 = vmatprep.subr.mxu0 0.0
    %371 = vmatpush1.msra.mxu0 0.0
    %372 = vmatprep.subr.mxu0 0.0
    %373 = vmatpush1.msra.mxu0 0.0
    %374 = vmatprep.subr.mxu0 0.0
    %375 = vmatpush1.msra.mxu0 0.0
    %376 = vmatprep.subr.mxu0 0.0
    %377 = vmatpush1.msra.mxu0 0.0
    %378 = vmatprep.subr.mxu0 0.0
    %379 = vmatpush1.msra.mxu0 0.0
    %380 = vmatprep.subr.mxu0 0.0
    %381 = vmatpush1.msra.mxu0 0.0
    %382 = vmatprep.subr.mxu0 0.0
    %383 = vmatpush1.msra.mxu0 0.0
    %384 = vmatprep.subr.mxu0 0.0
    %385 = vmatpush1.msra.mxu0 0.0
    %386 = vmatprep.subr.mxu0 0.0
    %387 = vmatpush1.msra.mxu0 0.0
    %388 = vmatprep.subr.mxu0 0.0
    %389 = vmatpush1.msra.mxu0 0.0
    %390 = vmatprep.subr.mxu0 0.0
    %391 = vmatpush1.msra.mxu0 0.0
    %392 = vmatprep.subr.mxu0 0.0
    %393 = vmatpush1.msra.mxu0 0.0
    %394 = vmatprep.subr.mxu0 0.0
    %395 = vmatpush1.msra.mxu0 0.0
    %396 = vmatprep.subr.mxu0 0.0
    %397 = vmatpush1.msra.mxu0 0.0
    %398 = vmatprep.subr.mxu0 0.0
    %399 = vmatpush1.msra.mxu0 0.0
    %400 = vmatprep.subr.mxu0 0.0
    %401 = vmatpush1.msra.mxu0 0.0
    %402 = vmatprep.subr.mxu0 0.0
    %403 = vmatpush1.msra.mxu0 0.0
    %404 = vmatprep.subr.mxu0 0.0
    %405 = vmatpush1.msra.mxu0 0.0
    %406 = vmatprep.subr.mxu0 0.0
    %407 = vmatpush1.msra.mxu0 0.0
    %408 = vmatprep.subr.mxu0 0.0
    %409 = vmatpush1.msra.mxu0 0.0
    %410 = vmatprep.subr.mxu0 0.0
    %411 = vmatpush1.msra.mxu0 0.0
    %412 = vmatprep.mubr.f32.mxu0 0.0
    %413 = vmatmul.mubr.f32.gmra.mrb[0].mxu0 %v346
    %v414 = vpop.f32.mrb[0].mxu0
    %v415 = vadd.f32 0.0, %v414
    %v416 = vpop.f32.mrb[0].mxu0
    %417 = vdwg.mxu0
    %418 = vrot.lane.b32.xlu0 %v143, 64
    %v419 = vpop.permute.xlu0 %418
    %v422 = vsel %vm319, %v341, 0
    %424 = vmatprep.subr.mxu0 0.0
    %425 = vmatpush1.msra.mxu0 %v419
    %426 = vmatprep.subr.mxu0 0.0
    %427 = vmatpush1.msra.mxu0 0.0
    %428 = vmatprep.subr.mxu0 0.0
    %429 = vmatpush1.msra.mxu0 0.0
    %430 = vmatprep.subr.mxu0 0.0
    %431 = vmatpush1.msra.mxu0 0.0
    %432 = vmatprep.subr.mxu0 0.0
    %433 = vmatpush1.msra.mxu0 0.0
    %434 = vmatprep.subr.mxu0 0.0
    %435 = vmatpush1.msra.mxu0 0.0
    %436 = vmatprep.subr.mxu0 0.0
    %437 = vmatpush1.msra.mxu0 0.0
    %438 = vmatprep.subr.mxu0 0.0
    %439 = vmatpush1.msra.mxu0 0.0
    %440 = vmatprep.subr.mxu0 0.0
    %441 = vmatpush1.msra.mxu0 0.0
    %442 = vmatprep.subr.mxu0 0.0
    %443 = vmatpush1.msra.mxu0 0.0
    %444 = vmatprep.subr.mxu0 0.0
    %445 = vmatpush1.msra.mxu0 0.0
    %446 = vmatprep.subr.mxu0 0.0
    %447 = vmatpush1.msra.mxu0 0.0
    %448 = vmatprep.subr.mxu0 0.0
    %449 = vmatpush1.msra.mxu0 0.0
    %450 = vmatprep.subr.mxu0 0.0
    %451 = vmatpush1.msra.mxu0 0.0
    %452 = vmatprep.subr.mxu0 0.0
    %453 = vmatpush1.msra.mxu0 0.0
    %454 = vmatprep.subr.mxu0 0.0
    %455 = vmatpush1.msra.mxu0 0.0
    %456 = vmatprep.subr.mxu0 0.0
    %457 = vmatpush1.msra.mxu0 0.0
    %458 = vmatprep.subr.mxu0 0.0
    %459 = vmatpush1.msra.mxu0 0.0
    %460 = vmatprep.subr.mxu0 0.0
    %461 = vmatpush1.msra.mxu0 0.0
    %462 = vmatprep.subr.mxu0 0.0
    %463 = vmatpush1.msra.mxu0 0.0
    %464 = vmatprep.subr.mxu0 0.0
    %465 = vmatpush1.msra.mxu0 0.0
    %466 = vmatprep.subr.mxu0 0.0
    %467 = vmatpush1.msra.mxu0 0.0
    %468 = vmatprep.subr.mxu0 0.0
    %469 = vmatpush1.msra.mxu0 0.0
    %470 = vmatprep.subr.mxu0 0.0
    %471 = vmatpush1.msra.mxu0 0.0
    %472 = vmatprep.subr.mxu0 0.0
    %473 = vmatpush1.msra.mxu0 0.0
    %474 = vmatprep.subr.mxu0 0.0
    %475 = vmatpush1.msra.mxu0 0.0
    %476 = vmatprep.subr.mxu0 0.0
    %477 = vmatpush1.msra.mxu0 0.0
    %478 = vmatprep.subr.mxu0 0.0
    %479 = vmatpush1.msra.mxu0 0.0
    %480 = vmatprep.subr.mxu0 0.0
    %481 = vmatpush1.msra.mxu0 0.0
    %482 = vmatprep.subr.mxu0 0.0
    %483 = vmatpush1.msra.mxu0 0.0
    %484 = vmatprep.subr.mxu0 0.0
    %485 = vmatpush1.msra.mxu0 0.0
    %486 = vmatprep.subr.mxu0 0.0
    %487 = vmatpush1.msra.mxu0 0.0
    %488 = vmatprep.mubr.f32.mxu0 0.0
    %489 = vmatmul.mubr.f32.gmra.mrb[0].mxu0 %v422
    %v490 = vpop.f32.mrb[0].mxu0
    %v491 = vadd.f32 0.0, %v490
    %v492 = vpop.f32.mrb[0].mxu0
    %493 = vdwg.mxu0
    %494 = vrot.lane.b32.xlu0 %v148, 112
    %v495 = vpop.permute.xlu0 %494
    %496 = vrot.lane.b32.xlu0 %v138, 80
    %v497 = vpop.permute.xlu0 %496
    %v498 = vsel %vm165, %v495, 0
    %v500 = vsel %vm165, %v497, 0
    %502 = vmatprep.subr.mxu0 0.0
    %503 = vmatpush1.xpose.msra.mxu0 %v500
    %504 = vmatprep.subr.mxu0 0.0
    %505 = vmatpush1.xpose.msra.mxu0 0.0
    %506 = vmatprep.subr.mxu0 0.0
    %507 = vmatpush1.xpose.msra.mxu0 0.0
    %508 = vmatprep.subr.mxu0 0.0
    %509 = vmatpush1.xpose.msra.mxu0 0.0
    %510 = vmatprep.subr.mxu0 0.0
    %511 = vmatpush1.xpose.msra.mxu0 0.0
    %512 = vmatprep.subr.mxu0 0.0
    %513 = vmatpush1.xpose.msra.mxu0 0.0
    %514 = vmatprep.subr.mxu0 0.0
    %515 = vmatpush1.xpose.msra.mxu0 0.0
    %516 = vmatprep.subr.mxu0 0.0
    %517 = vmatpush1.xpose.msra.mxu0 0.0
    %518 = vmatprep.subr.mxu0 0.0
    %519 = vmatpush1.xpose.msra.mxu0 0.0
    %520 = vmatprep.subr.mxu0 0.0
    %521 = vmatpush1.xpose.msra.mxu0 0.0
    %522 = vmatprep.subr.mxu0 0.0
    %523 = vmatpush1.xpose.msra.mxu0 0.0
    %524 = vmatprep.subr.mxu0 0.0
    %525 = vmatpush1.xpose.msra.mxu0 0.0
    %526 = vmatprep.subr.mxu0 0.0
    %527 = vmatpush1.xpose.msra.mxu0 0.0
    %528 = vmatprep.subr.mxu0 0.0
    %529 = vmatpush1.xpose.msra.mxu0 0.0
    %530 = vmatprep.subr.mxu0 0.0
    %531 = vmatpush1.xpose.msra.mxu0 0.0
    %532 = vmatprep.subr.mxu0 0.0
    %533 = vmatpush1.xpose.msra.mxu0 0.0
    %534 = vmatprep.subr.mxu0 0.0
    %535 = vmatpush1.xpose.msra.mxu0 0.0
    %536 = vmatprep.subr.mxu0 0.0
    %537 = vmatpush1.xpose.msra.mxu0 0.0
    %538 = vmatprep.subr.mxu0 0.0
    %539 = vmatpush1.xpose.msra.mxu0 0.0
    %540 = vmatprep.subr.mxu0 0.0
    %541 = vmatpush1.xpose.msra.mxu0 0.0
    %542 = vmatprep.subr.mxu0 0.0
    %543 = vmatpush1.xpose.msra.mxu0 0.0
    %544 = vmatprep.subr.mxu0 0.0
    %545 = vmatpush1.xpose.msra.mxu0 0.0
    %546 = vmatprep.subr.mxu0 0.0
    %547 = vmatpush1.xpose.msra.mxu0 0.0
    %548 = vmatprep.subr.mxu0 0.0
    %549 = vmatpush1.xpose.msra.mxu0 0.0
    %550 = vmatprep.subr.mxu0 0.0
    %551 = vmatpush1.xpose.msra.mxu0 0.0
    %552 = vmatprep.subr.mxu0 0.0
    %553 = vmatpush1.xpose.msra.mxu0 0.0
    %554 = vmatprep.subr.mxu0 0.0
    %555 = vmatpush1.xpose.msra.mxu0 0.0
    %556 = vmatprep.subr.mxu0 0.0
    %557 = vmatpush1.xpose.msra.mxu0 0.0
    %558 = vmatprep.subr.mxu0 0.0
    %559 = vmatpush1.xpose.msra.mxu0 0.0
    %560 = vmatprep.subr.mxu0 0.0
    %561 = vmatpush1.xpose.msra.mxu0 0.0
    %562 = vmatprep.subr.mxu0 0.0
    %563 = vmatpush1.xpose.msra.mxu0 0.0
    %564 = vmatprep.subr.mxu0 0.0
    %565 = vmatpush1.xpose.msra.mxu0 0.0
    %566 = vmatprep.mubr.f32.mxu0 0.0
    %567 = vmatmul.mubr.f32.gmra.mrb[0].mxu0 %v498
    %v568 = vpop.f32.mrb[0].mxu0
    %v569 = vadd.f32 %v155, %v568
    %v570 = vpop.f32.mrb[0].mxu0
    %571 = vdwg.mxu0
    %572 = vrot.lane.b32.xlu0 %v149, 112
    %v573 = vpop.permute.xlu0 %572
    %574 = vrot.lane.b32.xlu0 %v143, 80
    %v575 = vpop.permute.xlu0 %574
    %v576 = vsel %vm165, %v573, 0
    %v578 = vsel %vm165, %v575, 0
    %580 = vmatprep.subr.mxu0 0.0
    %581 = vmatpush1.xpose.msra.mxu0 %v578
    %582 = vmatprep.subr.mxu0 0.0
    %583 = vmatpush1.xpose.msra.mxu0 0.0
    %584 = vmatprep.subr.mxu0 0.0
    %585 = vmatpush1.xpose.msra.mxu0 0.0
    %586 = vmatprep.subr.mxu0 0.0
    %587 = vmatpush1.xpose.msra.mxu0 0.0
    %588 = vmatprep.subr.mxu0 0.0
    %589 = vmatpush1.xpose.msra.mxu0 0.0
    %590 = vmatprep.subr.mxu0 0.0
    %591 = vmatpush1.xpose.msra.mxu0 0.0
    %592 = vmatprep.subr.mxu0 0.0
    %593 = vmatpush1.xpose.msra.mxu0 0.0
    %594 = vmatprep.subr.mxu0 0.0
    %595 = vmatpush1.xpose.msra.mxu0 0.0
    %596 = vmatprep.subr.mxu0 0.0
    %597 = vmatpush1.xpose.msra.mxu0 0.0
    %598 = vmatprep.subr.mxu0 0.0
    %599 = vmatpush1.xpose.msra.mxu0 0.0
    %600 = vmatprep.subr.mxu0 0.0
    %601 = vmatpush1.xpose.msra.mxu0 0.0
    %602 = vmatprep.subr.mxu0 0.0
    %603 = vmatpush1.xpose.msra.mxu0 0.0
    %604 = vmatprep.subr.mxu0 0.0
    %605 = vmatpush1.xpose.msra.mxu0 0.0
    %606 = vmatprep.subr.mxu0 0.0
    %607 = vmatpush1.xpose.msra.mxu0 0.0
    %608 = vmatprep.subr.mxu0 0.0
    %609 = vmatpush1.xpose.msra.mxu0 0.0
    %610 = vmatprep.subr.mxu0 0.0
    %611 = vmatpush1.xpose.msra.mxu0 0.0
    %612 = vmatprep.subr.mxu0 0.0
    %613 = vmatpush1.xpose.msra.mxu0 0.0
    %614 = vmatprep.subr.mxu0 0.0
    %615 = vmatpush1.xpose.msra.mxu0 0.0
    %616 = vmatprep.subr.mxu0 0.0
    %617 = vmatpush1.xpose.msra.mxu0 0.0
    %618 = vmatprep.subr.mxu0 0.0
    %619 = vmatpush1.xpose.msra.mxu0 0.0
    %620 = vmatprep.subr.mxu0 0.0
    %621 = vmatpush1.xpose.msra.mxu0 0.0
    %622 = vmatprep.subr.mxu0 0.0
    %623 = vmatpush1.xpose.msra.mxu0 0.0
    %624 = vmatprep.subr.mxu0 0.0
    %625 = vmatpush1.xpose.msra.mxu0 0.0
    %626 = vmatprep.subr.mxu0 0.0
    %627 = vmatpush1.xpose.msra.mxu0 0.0
    %628 = vmatprep.subr.mxu0 0.0
    %629 = vmatpush1.xpose.msra.mxu0 0.0
    %630 = vmatprep.subr.mxu0 0.0
    %631 = vmatpush1.xpose.msra.mxu0 0.0
    %632 = vmatprep.subr.mxu0 0.0
    %633 = vmatpush1.xpose.msra.mxu0 0.0
    %634 = vmatprep.subr.mxu0 0.0
    %635 = vmatpush1.xpose.msra.mxu0 0.0
    %636 = vmatprep.subr.mxu0 0.0
    %637 = vmatpush1.xpose.msra.mxu0 0.0
    %638 = vmatprep.subr.mxu0 0.0
    %639 = vmatpush1.xpose.msra.mxu0 0.0
    %640 = vmatprep.subr.mxu0 0.0
    %641 = vmatpush1.xpose.msra.mxu0 0.0
    %642 = vmatprep.subr.mxu0 0.0
    %643 = vmatpush1.xpose.msra.mxu0 0.0
    %644 = vmatprep.mubr.f32.mxu0 0.0
    %645 = vmatmul.mubr.f32.gmra.mrb[0].mxu0 %v576
    %v646 = vpop.f32.mrb[0].mxu0
    %v647 = vadd.f32 %v159, %v646
    %v648 = vpop.f32.mrb[0].mxu0
    %649 = vdwg.mxu0
    %v650 = vsel %vm319, %v569, -inf
    %651 = vmax.xlane.f32.xlu0 %v650
    %v652 = vpop.xlane.xlu0 %651
    %v653 = vsel %vm319, %v647, -inf
    %654 = vmax.xlane.f32.xlu0 %v653
    %v655 = vpop.xlane.xlu0 %654
    %v656 = vsub.f32 %v569, %v652
    %v657 = vsub.f32 %v647, %v655
    %v658 = vmul.f32 %v656, 1.442695
    %v659 = vpow.pop %v658
    %v660 = vmul.f32 %v657, 1.442695
    %v661 = vpow.pop %v660
    %v662 = vsel %vm319, %v659, 0.0
    %663 = vadd.xlane.f32.xlu0 %v662
    %v664 = vpop.xlane.xlu0 %663
    %v665 = vsel %vm319, %v661, 0.0
    %666 = vadd.xlane.f32.xlu0 %v665
    %v667 = vpop.xlane.xlu0 %666
    %v668 = vrcp.pop %v664
    %v669 = vrcp.pop %v667
    %v670 = vmul.f32 %v659, %v668
    %v671 = vmul.f32 %v661, %v669
    %672 = vrot.lane.b32.xlu0 %v138, 48
    %v673 = vpop.permute.xlu0 %672
    %v676 = vsel %vm319, %v670, 0
    %678 = vmatprep.subr.mxu0 0.0
    %679 = vmatpush1.msra.mxu0 %v673
    %680 = vmatprep.subr.mxu0 0.0
    %681 = vmatpush1.msra.mxu0 0.0
    %682 = vmatprep.subr.mxu0 0.0
    %683 = vmatpush1.msra.mxu0 0.0
    %684 = vmatprep.subr.mxu0 0.0
    %685 = vmatpush1.msra.mxu0 0.0
    %686 = vmatprep.subr.mxu0 0.0
    %687 = vmatpush1.msra.mxu0 0.0
    %688 = vmatprep.subr.mxu0 0.0
    %689 = vmatpush1.msra.mxu0 0.0
    %690 = vmatprep.subr.mxu0 0.0
    %691 = vmatpush1.msra.mxu0 0.0
    %692 = vmatprep.subr.mxu0 0.0
    %693 = vmatpush1.msra.mxu0 0.0
    %694 = vmatprep.subr.mxu0 0.0
    %695 = vmatpush1.msra.mxu0 0.0
    %696 = vmatprep.subr.mxu0 0.0
    %697 = vmatpush1.msra.mxu0 0.0
    %698 = vmatprep.subr.mxu0 0.0
    %699 = vmatpush1.msra.mxu0 0.0
    %700 = vmatprep.subr.mxu0 0.0
    %701 = vmatpush1.msra.mxu0 0.0
    %702 = vmatprep.subr.mxu0 0.0
    %703 = vmatpush1.msra.mxu0 0.0
    %704 = vmatprep.subr.mxu0 0.0
    %705 = vmatpush1.msra.mxu0 0.0
    %706 = vmatprep.subr.mxu0 0.0
    %707 = vmatpush1.msra.mxu0 0.0
    %708 = vmatprep.subr.mxu0 0.0
    %709 = vmatpush1.msra.mxu0 0.0
    %710 = vmatprep.subr.mxu0 0.0
    %711 = vmatpush1.msra.mxu0 0.0
    %712 = vmatprep.subr.mxu0 0.0
    %713 = vmatpush1.msra.mxu0 0.0
    %714 = vmatprep.subr.mxu0 0.0
    %715 = vmatpush1.msra.mxu0 0.0
    %716 = vmatprep.subr.mxu0 0.0
    %717 = vmatpush1.msra.mxu0 0.0
    %718 = vmatprep.subr.mxu0 0.0
    %719 = vmatpush1.msra.mxu0 0.0
    %720 = vmatprep.subr.mxu0 0.0
    %721 = vmatpush1.msra.mxu0 0.0
    %722 = vmatprep.subr.mxu0 0.0
    %723 = vmatpush1.msra.mxu0 0.0
    %724 = vmatprep.subr.mxu0 0.0
    %725 = vmatpush1.msra.mxu0 0.0
    %726 = vmatprep.subr.mxu0 0.0
    %727 = vmatpush1.msra.mxu0 0.0
    %728 = vmatprep.subr.mxu0 0.0
    %729 = vmatpush1.msra.mxu0 0.0
    %730 = vmatprep.subr.mxu0 0.0
    %731 = vmatpush1.msra.mxu0 0.0
    %732 = vmatprep.subr.mxu0 0.0
    %733 = vmatpush1.msra.mxu0 0.0
    %734 = vmatprep.subr.mxu0 0.0
    %735 = vmatpush1.msra.mxu0 0.0
    %736 = vmatprep.subr.mxu0 0.0
    %737 = vmatpush1.msra.mxu0 0.0
    %738 = vmatprep.subr.mxu0 0.0
    %739 = vmatpush1.msra.mxu0 0.0
    %740 = vmatprep.subr.mxu0 0.0
    %741 = vmatpush1.msra.mxu0 0.0
    %742 = vmatprep.mubr.f32.mxu0 0.0
    %743 = vmatmul.mubr.f32.gmra.mrb[0].mxu0 %v676
    %v744 = vpop.f32.mrb[0].mxu0
    %v745 = vadd.f32 0.0, %v744
    %v746 = vpop.f32.mrb[0].mxu0
    %747 = vdwg.mxu0
    %748 = vrot.lane.b32.xlu0 %v143, 48
    %v749 = vpop.permute.xlu0 %748
    %v752 = vsel %vm319, %v671, 0
    %754 = vmatprep.subr.mxu0 0.0
    %755 = vmatpush1.msra.mxu0 %v749
    %756 = vmatprep.subr.mxu0 0.0
    %757 = vmatpush1.msra.mxu0 0.0
    %758 = vmatprep.subr.mxu0 0.0
    %759 = vmatpush1.msra.mxu0 0.0
    %760 = vmatprep.subr.mxu0 0.0
    %761 = vmatpush1.msra.mxu0 0.0
    %762 = vmatprep.subr.mxu0 0.0
    %763 = vmatpush1.msra.mxu0 0.0
    %764 = vmatprep.subr.mxu0 0.0
    %765 = vmatpush1.msra.mxu0 0.0
    %766 = vmatprep.subr.mxu0 0.0
    %767 = vmatpush1.msra.mxu0 0.0
    %768 = vmatprep.subr.mxu0 0.0
    %769 = vmatpush1.msra.mxu0 0.0
    %770 = vmatprep.subr.mxu0 0.0
    %771 = vmatpush1.msra.mxu0 0.0
    %772 = vmatprep.subr.mxu0 0.0
    %773 = vmatpush1.msra.mxu0 0.0
    %774 = vmatprep.subr.mxu0 0.0
    %775 = vmatpush1.msra.mxu0 0.0
    %776 = vmatprep.subr.mxu0 0.0
    %777 = vmatpush1.msra.mxu0 0.0
    %778 = vmatprep.subr.mxu0 0.0
    %779 = vmatpush1.msra.mxu0 0.0
    %780 = vmatprep.subr.mxu0 0.0
    %781 = vmatpush1.msra.mxu0 0.0
    %782 = vmatprep.subr.mxu0 0.0
    %783 = vmatpush1.msra.mxu0 0.0
    %784 = vmatprep.subr.mxu0 0.0
    %785 = vmatpush1.msra.mxu0 0.0
    %786 = vmatprep.subr.mxu0 0.0
    %787 = vmatpush1.msra.mxu0 0.0
    %788 = vmatprep.subr.mxu0 0.0
    %789 = vmatpush1.msra.mxu0 0.0
    %790 = vmatprep.subr.mxu0 0.0
    %791 = vmatpush1.msra.mxu0 0.0
    %792 = vmatprep.subr.mxu0 0.0
    %793 = vmatpush1.msra.mxu0 0.0
    %794 = vmatprep.subr.mxu0 0.0
    %795 = vmatpush1.msra.mxu0 0.0
    %796 = vmatprep.subr.mxu0 0.0
    %797 = vmatpush1.msra.mxu0 0.0
    %798 = vmatprep.subr.mxu0 0.0
    %799 = vmatpush1.msra.mxu0 0.0
    %800 = vmatprep.subr.mxu0 0.0
    %801 = vmatpush1.msra.mxu0 0.0
    %802 = vmatprep.subr.mxu0 0.0
    %803 = vmatpush1.msra.mxu0 0.0
    %804 = vmatprep.subr.mxu0 0.0
    %805 = vmatpush1.msra.mxu0 0.0
    %806 = vmatprep.subr.mxu0 0.0
    %807 = vmatpush1.msra.mxu0 0.0
    %808 = vmatprep.subr.mxu0 0.0
    %809 = vmatpush1.msra.mxu0 0.0
    %810 = vmatprep.subr.mxu0 0.0
    %811 = vmatpush1.msra.mxu0 0.0
    %812 = vmatprep.subr.mxu0 0.0
    %813 = vmatpush1.msra.mxu0 0.0
    %814 = vmatprep.subr.mxu0 0.0
    %815 = vmatpush1.msra.mxu0 0.0
    %816 = vmatprep.subr.mxu0 0.0
    %817 = vmatpush1.msra.mxu0 0.0
    %818 = vmatprep.mubr.f32.mxu0 0.0
    %819 = vmatmul.mubr.f32.gmra.mrb[0].mxu0 %v752
    %v820 = vpop.f32.mrb[0].mxu0
    %v821 = vadd.f32 0.0, %v820
    %v822 = vpop.f32.mrb[0].mxu0
    %823 = vdwg.mxu0
    %826 = vrot.lane.b32.xlu0 %v745, 16
    %v827 = vpop.permute.xlu0 %826
    %828 = vrot.lane.b32.xlu0 %v821, 16
    %v829 = vpop.permute.xlu0 %828
    %v832 = vsel %vm165, %v415, %v827
    %v833 = vsel %vm165, %v491, %v829
    %v834 = vld [vmem:[%s5] sm:$0xff]
    %v835 = vld [vmem:[%s5 + $0x8] sm:$0xff]
    %v836 = vld [vmem:[%s5 + $0x10] sm:$0xff]
    %v837 = vld [vmem:[%s5 + $0x18] sm:$0xff]
    %v838 = vld [vmem:[%s6] sm:$0x1]
    %v840 = vlaneseq
    %v841 = vshrl.u32 %v840, 7
    %v842 = vsub.s32 0, %v841
    %v843 = vrot.slane %v838, %v842
    %v846 = vsel %vm64, %v832, 0
    %v849 = vsel %vm64, %v833, 0
    %851 = vmatprep.subr.mxu0 0.0
    %852 = vmatpush1.msra.mxu0 %v834
    %853 = vmatprep.subr.mxu0 0.0
    %854 = vmatpush1.msra.mxu0 %v835
    %855 = vmatprep.subr.mxu0 0.0
    %856 = vmatpush1.msra.mxu0 %v836
    %857 = vmatprep.subr.mxu0 0.0
    %858 = vmatpush1.msra.mxu0 %v837
    %859 = vmatprep.subr.mxu0 0.0
    %860 = vmatpush1.msra.mxu0 0.0
    %861 = vmatprep.subr.mxu0 0.0
    %862 = vmatpush1.msra.mxu0 0.0
    %863 = vmatprep.subr.mxu0 0.0
    %864 = vmatpush1.msra.mxu0 0.0
    %865 = vmatprep.subr.mxu0 0.0
    %866 = vmatpush1.msra.mxu0 0.0
    %867 = vmatprep.subr.mxu0 0.0
    %868 = vmatpush1.msra.mxu0 0.0
    %869 = vmatprep.subr.mxu0 0.0
    %870 = vmatpush1.msra.mxu0 0.0
    %871 = vmatprep.subr.mxu0 0.0
    %872 = vmatpush1.msra.mxu0 0.0
    %873 = vmatprep.subr.mxu0 0.0
    %874 = vmatpush1.msra.mxu0 0.0
    %875 = vmatprep.subr.mxu0 0.0
    %876 = vmatpush1.msra.mxu0 0.0
    %877 = vmatprep.subr.mxu0 0.0
    %878 = vmatpush1.msra.mxu0 0.0
    %879 = vmatprep.subr.mxu0 0.0
    %880 = vmatpush1.msra.mxu0 0.0
    %881 = vmatprep.subr.mxu0 0.0
    %882 = vmatpush1.msra.mxu0 0.0
    %883 = vmatprep.subr.mxu0 0.0
    %884 = vmatpush1.msra.mxu0 0.0
    %885 = vmatprep.subr.mxu0 0.0
    %886 = vmatpush1.msra.mxu0 0.0
    %887 = vmatprep.subr.mxu0 0.0
    %888 = vmatpush1.msra.mxu0 0.0
    %889 = vmatprep.subr.mxu0 0.0
    %890 = vmatpush1.msra.mxu0 0.0
    %891 = vmatprep.subr.mxu0 0.0
    %892 = vmatpush1.msra.mxu0 0.0
    %893 = vmatprep.subr.mxu0 0.0
    %894 = vmatpush1.msra.mxu0 0.0
    %895 = vmatprep.subr.mxu0 0.0
    %896 = vmatpush1.msra.mxu0 0.0
    %897 = vmatprep.subr.mxu0 0.0
    %898 = vmatpush1.msra.mxu0 0.0
    %899 = vmatprep.subr.mxu0 0.0
    %900 = vmatpush1.msra.mxu0 0.0
    %901 = vmatprep.subr.mxu0 0.0
    %902 = vmatpush1.msra.mxu0 0.0
    %903 = vmatprep.subr.mxu0 0.0
    %904 = vmatpush1.msra.mxu0 0.0
    %905 = vmatprep.subr.mxu0 0.0
    %906 = vmatpush1.msra.mxu0 0.0
    %907 = vmatprep.subr.mxu0 0.0
    %908 = vmatpush1.msra.mxu0 0.0
    %909 = vmatprep.subr.mxu0 0.0
    %910 = vmatpush1.msra.mxu0 0.0
    %911 = vmatprep.subr.mxu0 0.0
    %912 = vmatpush1.msra.mxu0 0.0
    %913 = vmatprep.subr.mxu0 0.0
    %914 = vmatpush1.msra.mxu0 0.0
    %915 = vmatprep.mubr.f32.mxu0 0.0
    %916 = vmatmul.mubr.f32.gmra.mrb[0].mxu0 %v846
    %v917 = vpop.f32.mrb[0].mxu0
    %v918 = vadd.f32 %v843, %v917
    %v919 = vpop.f32.mrb[0].mxu0
    %920 = vmatprep.mubr.f32.mxu0 0.0
    %921 = vmatmul.mubr.f32.gmra.mrb[0].mxu0 %v849
    %v922 = vpop.f32.mrb[0].mxu0
    %v923 = vadd.f32 %v843, %v922
    %v924 = vpop.f32.mrb[0].mxu0
    %925 = vdwg.mxu0
    %v926 = vadd.f32 %v51, %v918
    %v927 = vadd.f32 %v52, %v923
    %v928 = vld [vmem:[%s7] sm:$0x1]
    %v929 = vld [vmem:[%s8] sm:$0x1]
    %v930 = vsel %vm64, %v926, 0.0
    %931 = vadd.xlane.f32.xlu0 %v930
    %v932 = vpop.xlane.xlu0 %931
    %v933 = vsel %vm64, %v927, 0.0
    %934 = vadd.xlane.f32.xlu0 %v933
    %v935 = vpop.xlane.xlu0 %934
    %v936 = vrcp.pop 32.0
    %v937 = vmul.f32 %v932, %v936
    %v938 = vmul.f32 %v935, %v936
    %v939 = vsub.f32 %v926, %v937
    %v940 = vsub.f32 %v927, %v938
    %v941 = vmul.f32 %v939, %v939
    %v942 = vmul.f32 %v940, %v940
    %v943 = vsel %vm64, %v941, 0.0
    %944 = vadd.xlane.f32.xlu0 %v943
    %v945 = vpop.xlane.xlu0 %944
    %v946 = vsel %vm64, %v942, 0.0
    %947 = vadd.xlane.f32.xlu0 %v946
    %v948 = vpop.xlane.xlu0 %947
    %v949 = vmul.f32 %v945, %v936
    %v950 = vmul.f32 %v948, %v936
    %v951 = vadd.f32 %v949, 1e-05
    %v952 = vadd.f32 %v950, 1e-05
    %v953 = vrsqrt.pop %v951
    %v954 = vrsqrt.pop %v952
    %v955 = vmul.f32 %v939, %v953
    %v956 = vmul.f32 %v940, %v954
    %v958 = vlaneseq
    %v959 = vshrl.u32 %v958, 7
    %v960 = vsub.s32 0, %v959
    %v961 = vrot.slane %v928, %v960
    %v963 = vmul.f32 %v955, %v961
    %v964 = vmul.f32 %v956, %v961
    %v966 = vlaneseq
    %v967 = vshrl.u32 %v966, 7
    %v968 = vsub.s32 0, %v967
    %v969 = vrot.slane %v929, %v968
    %v971 = vadd.f32 %v963, %v969
    %v972 = vadd.f32 %v964, %v969
    %v973 = vld [vmem:[%s9] sm:$0xff]
    %v974 = vld [vmem:[%s9 + $0x8] sm:$0xff]
    %v975 = vld [vmem:[%s9 + $0x10] sm:$0xff]
    %v976 = vld [vmem:[%s9 + $0x18] sm:$0xff]
    %v977 = vld [vmem:[%s10] sm:$0x1]
    %v979 = vlaneseq
    %v980 = vshrl.u32 %v979, 7
    %v981 = vsub.s32 0, %v980
    %v982 = vrot.slane %v977, %v981
    %v985 = vsel %vm64, %v971, 0
    %v988 = vsel %vm64, %v972, 0
    %990 = vmatprep.subr.mxu0 0.0
    %991 = vmatpush1.msra.mxu0 %v973
    %992 = vmatprep.subr.mxu0 0.0
    %993 = vmatpush1.msra.mxu0 %v974
    %994 = vmatprep.subr.mxu0 0.0
    %995 = vmatpush1.msra.mxu0 %v975
    %996 = vmatprep.subr.mxu0 0.0
    %997 = vmatpush1.msra.mxu0 %v976
    %998 = vmatprep.subr.mxu0 0.0
    %999 = vmatpush1.msra.mxu0 0.0
    %1000 = vmatprep.subr.mxu0 0.0
    %1001 = vmatpush1.msra.mxu0 0.0
    %1002 = vmatprep.subr.mxu0 0.0
    %1003 = vmatpush1.msra.mxu0 0.0
    %1004 = vmatprep.subr.mxu0 0.0
    %1005 = vmatpush1.msra.mxu0 0.0
    %1006 = vmatprep.subr.mxu0 0.0
    %1007 = vmatpush1.msra.mxu0 0.0
    %1008 = vmatprep.subr.mxu0 0.0
    %1009 = vmatpush1.msra.mxu0 0.0
    %1010 = vmatprep.subr.mxu0 0.0
    %1011 = vmatpush1.msra.mxu0 0.0
    %1012 = vmatprep.subr.mxu0 0.0
    %1013 = vmatpush1.msra.mxu0 0.0
    %1014 = vmatprep.subr.mxu0 0.0
    %1015 = vmatpush1.msra.mxu0 0.0
    %1016 = vmatprep.subr.mxu0 0.0
    %1017 = vmatpush1.msra.mxu0 0.0
    %1018 = vmatprep.subr.mxu0 0.0
    %1019 = vmatpush1.msra.mxu0 0.0
    %1020 = vmatprep.subr.mxu0 0.0
    %1021 = vmatpush1.msra.mxu0 0.0
    %1022 = vmatprep.subr.mxu0 0.0
    %1023 = vmatpush1.msra.mxu0 0.0
    %1024 = vmatprep.subr.mxu0 0.0
    %1025 = vmatpush1.msra.mxu0 0.0
    %1026 = vmatprep.subr.mxu0 0.0
    %1027 = vmatpush1.msra.mxu0 0.0
    %1028 = vmatprep.subr.mxu0 0.0
    %1029 = vmatpush1.msra.mxu0 0.0
    %1030 = vmatprep.subr.mxu0 0.0
    %1031 = vmatpush1.msra.mxu0 0.0
    %1032 = vmatprep.subr.mxu0 0.0
    %1033 = vmatpush1.msra.mxu0 0.0
    %1034 = vmatprep.subr.mxu0 0.0
    %1035 = vmatpush1.msra.mxu0 0.0
    %1036 = vmatprep.subr.mxu0 0.0
    %1037 = vmatpush1.msra.mxu0 0.0
    %1038 = vmatprep.subr.mxu0 0.0
    %1039 = vmatpush1.msra.mxu0 0.0
    %1040 = vmatprep.subr.mxu0 0.0
    %1041 = vmatpush1.msra.mxu0 0.0
    %1042 = vmatprep.subr.mxu0 0.0
    %1043 = vmatpush1.msra.mxu0 0.0
    %1044 = vmatprep.subr.mxu0 0.0
    %1045 = vmatpush1.msra.mxu0 0.0
    %1046 = vmatprep.subr.mxu0 0.0
    %1047 = vmatpush1.msra.mxu0 0.0
    %1048 = vmatprep.subr.mxu0 0.0
    %1049 = vmatpush1.msra.mxu0 0.0
    %1050 = vmatprep.subr.mxu0 0.0
    %1051 = vmatpush1.msra.mxu0 0.0
    %1052 = vmatprep.subr.mxu0 0.0
    %1053 = vmatpush1.msra.mxu0 0.0
    %1054 = vmatprep.mubr.f32.mxu0 0.0
    %1055 = vmatmul.mubr.f32.gmra.mrb[0].mxu0 %v985
    %v1056 = vpop.f32.mrb[0].mxu0
    %v1057 = vadd.f32 %v982, %v1056
    %v1058 = vpop.f32.mrb[0].mxu0
    %1059 = vmatprep.mubr.f32.mxu0 0.0
    %1060 = vmatmul.mubr.f32.gmra.mrb[0].mxu0 %v988
    %v1061 = vpop.f32.mrb[0].mxu0
    %v1062 = vadd.f32 %v982, %v1061
    %v1063 = vpop.f32.mrb[0].mxu0
    %1064 = vdwg.mxu0
    %v1065 = vmax.f32 %v1057, 0.0
    %v1066 = vmax.f32 %v1062, 0.0
    %v1067 = vld [vmem:[%s11] sm:$0xff]
    %v1068 = vld [vmem:[%s11 + $0x8] sm:$0xff]
    %v1069 = vld [vmem:[%s11 + $0x10] sm:$0xff]
    %v1070 = vld [vmem:[%s11 + $0x18] sm:$0xff]
    %v1071 = vld [vmem:[%s11 + $0x20] sm:$0xff]
    %v1072 = vld [vmem:[%s11 + $0x28] sm:$0xff]
    %v1073 = vld [vmem:[%s11 + $0x30] sm:$0xff]
    %v1074 = vld [vmem:[%s11 + $0x38] sm:$0xff]
    %v1075 = vld [vmem:[%s12] sm:$0x1]
    %v1077 = vlaneseq
    %v1078 = vshrl.u32 %v1077, 7
    %v1079 = vsub.s32 0, %v1078
    %v1080 = vrot.slane %v1075, %v1079
    %vm1082 = vcmask 523264
    %v1084 = vsel %vm1082, %v1065, 0
    %v1087 = vsel %vm1082, %v1066, 0
    %1089 = vmatprep.subr.mxu0 0.0
    %1090 = vmatpush1.msra.mxu0 %v1067
    %1091 = vmatprep.subr.mxu0 0.0
    %1092 = vmatpush1.msra.mxu0 %v1068
    %1093 = vmatprep.subr.mxu0 0.0
    %1094 = vmatpush1.msra.mxu0 %v1069
    %1095 = vmatprep.subr.mxu0 0.0
    %1096 = vmatpush1.msra.mxu0 %v1070
    %1097 = vmatprep.subr.mxu0 0.0
    %1098 = vmatpush1.msra.mxu0 %v1071
    %1099 = vmatprep.subr.mxu0 0.0
    %1100 = vmatpush1.msra.mxu0 %v1072
    %1101 = vmatprep.subr.mxu0 0.0
    %1102 = vmatpush1.msra.mxu0 %v1073
    %1103 = vmatprep.subr.mxu0 0.0
    %1104 = vmatpush1.msra.mxu0 %v1074
    %1105 = vmatprep.subr.mxu0 0.0
    %1106 = vmatpush1.msra.mxu0 0.0
    %1107 = vmatprep.subr.mxu0 0.0
    %1108 = vmatpush1.msra.mxu0 0.0
    %1109 = vmatprep.subr.mxu0 0.0
    %1110 = vmatpush1.msra.mxu0 0.0
    %1111 = vmatprep.subr.mxu0 0.0
    %1112 = vmatpush1.msra.mxu0 0.0
    %1113 = vmatprep.subr.mxu0 0.0
    %1114 = vmatpush1.msra.mxu0 0.0
    %1115 = vmatprep.subr.mxu0 0.0
    %1116 = vmatpush1.msra.mxu0 0.0
    %1117 = vmatprep.subr.mxu0 0.0
    %1118 = vmatpush1.msra.mxu0 0.0
    %1119 = vmatprep.subr.mxu0 0.0
    %1120 = vmatpush1.msra.mxu0 0.0
    %1121 = vmatprep.subr.mxu0 0.0
    %1122 = vmatpush1.msra.mxu0 0.0
    %1123 = vmatprep.subr.mxu0 0.0
    %1124 = vmatpush1.msra.mxu0 0.0
    %1125 = vmatprep.subr.mxu0 0.0
    %1126 = vmatpush1.msra.mxu0 0.0
    %1127 = vmatprep.subr.mxu0 0.0
    %1128 = vmatpush1.msra.mxu0 0.0
    %1129 = vmatprep.subr.mxu0 0.0
    %1130 = vmatpush1.msra.mxu0 0.0
    %1131 = vmatprep.subr.mxu0 0.0
    %1132 = vmatpush1.msra.mxu0 0.0
    %1133 = vmatprep.subr.mxu0 0.0
    %1134 = vmatpush1.msra.mxu0 0.0
    %1135 = vmatprep.subr.mxu0 0.0
    %1136 = vmatpush1.msra.mxu0 0.0
    %1137 = vmatprep.subr.mxu0 0.0
    %1138 = vmatpush1.msra.mxu0 0.0
    %1139 = vmatprep.subr.mxu0 0.0
    %1140 = vmatpush1.msra.mxu0 0.0
    %1141 = vmatprep.subr.mxu0 0.0
    %1142 = vmatpush1.msra.mxu0 0.0
    %1143 = vmatprep.subr.mxu0 0.0
    %1144 = vmatpush1.msra.mxu0 0.0
    %1145 = vmatprep.subr.mxu0 0.0
    %1146 = vmatpush1.msra.mxu0 0.0
    %1147 = vmatprep.subr.mxu0 0.0
    %1148 = vmatpush1.msra.mxu0 0.0
    %1149 = vmatprep.subr.mxu0 0.0
    %1150 = vmatpush1.msra.mxu0 0.0
    %1151 = vmatprep.subr.mxu0 0.0
    %1152 = vmatpush1.msra.mxu0 0.0
    %1153 = vmatprep.mubr.f32.mxu0 0.0
    %1154 = vmatmul.mubr.f32.gmra.mrb[0].mxu0 %v1084
    %v1155 = vpop.f32.mrb[0].mxu0
    %v1156 = vadd.f32 %v1080, %v1155
    %v1157 = vpop.f32.mrb[0].mxu0
    %1158 = vmatprep.mubr.f32.mxu0 0.0
    %1159 = vmatmul.mubr.f32.gmra.mrb[0].mxu0 %v1087
    %v1160 = vpop.f32.mrb[0].mxu0
    %v1161 = vadd.f32 %v1080, %v1160
    %v1162 = vpop.f32.mrb[0].mxu0
    %1163 = vdwg.mxu0
    %v1164 = vadd.f32 %v971, %v1156
    %v1165 = vadd.f32 %v972, %v1161
    %v1166 = vld [vmem:[%s13] sm:$0x1]
    %v1167 = vld [vmem:[%s14] sm:$0x1]
    %v1168 = vsel %vm64, %v1164, 0.0
    %1169 = vadd.xlane.f32.xlu0 %v1168
    %v1170 = vpop.xlane.xlu0 %1169
    %v1171 = vsel %vm64, %v1165, 0.0
    %1172 = vadd.xlane.f32.xlu0 %v1171
    %v1173 = vpop.xlane.xlu0 %1172
    %v1174 = vmul.f32 %v1170, %v936
    %v1175 = vmul.f32 %v1173, %v936
    %v1176 = vsub.f32 %v1164, %v1174
    %v1177 = vsub.f32 %v1165, %v1175
    %v1178 = vmul.f32 %v1176, %v1176
    %v1179 = vmul.f32 %v1177, %v1177
    %v1180 = vsel %vm64, %v1178, 0.0
    %1181 = vadd.xlane.f32.xlu0 %v1180
    %v1182 = vpop.xlane.xlu0 %1181
    %v1183 = vsel %vm64, %v1179, 0.0
    %1184 = vadd.xlane.f32.xlu0 %v1183
    %v1185 = vpop.xlane.xlu0 %1184
    %v1186 = vmul.f32 %v1182, %v936
    %v1187 = vmul.f32 %v1185, %v936
    %v1188 = vadd.f32 %v1186, 1e-05
    %v1189 = vadd.f32 %v1187, 1e-05
    %v1190 = vrsqrt.pop %v1188
    %v1191 = vrsqrt.pop %v1189
    %v1192 = vmul.f32 %v1176, %v1190
    %v1193 = vmul.f32 %v1177, %v1191
    %v1195 = vlaneseq
    %v1196 = vshrl.u32 %v1195, 7
    %v1197 = vsub.s32 0, %v1196
    %v1198 = vrot.slane %v1166, %v1197
    %v1200 = vmul.f32 %v1192, %v1198
    %v1201 = vmul.f32 %v1193, %v1198
    %v1203 = vlaneseq
    %v1204 = vshrl.u32 %v1203, 7
    %v1205 = vsub.s32 0, %v1204
    %v1206 = vrot.slane %v1167, %v1205
    %v1208 = vadd.f32 %v1200, %v1206
    %v1209 = vadd.f32 %v1201, %v1206
    %v1210 = vld [vmem:[%s2] sm:$0xff]
    %v1211 = vld [vmem:[%s2 + $0x8] sm:$0xff]
    %1213 = vset.pattern.permute.xlu0 0
    %1214 = vperm.xlu0 %1213, %v1210
    %v1215 = vpop.permute.xlu0 %1214
    %1218 = vset.pattern.permute.xlu0 0
    %1219 = vperm.xlu0 %1218, %v1211
    %v1220 = vpop.permute.xlu0 %1219
    %v1222 = vmul.f32 %v1208, %v1215
    %v1223 = vmul.f32 %v1209, %v1220
    %1224 = vst.msk [vmem:[#allocation2] sm:$0xff] %vm64, %v1222
    %1225 = vst.msk [vmem:[#allocation2 + $0x8] sm:$0xff] %vm64, %v1223
    // Predicated region
    $region62: #{tpu_custom_call.1} parent=1 // pred_check
      _
    $region63: #{tpu_custom_call.1} parent=1 // pred_check_branch
      %1227 = sbr.rel (0) target = $region65
    $region64: #{tpu_custom_call.1} parent=1 // pred_region
      %s1229 = ssub.s32 256, 256
      %1230 = vsyncadd [#allocation3], %s1229
      %s1231 = sshll.u32 [#allocation2], 4
      %s1232 = int_to_ptr.vmem [resolvable:$true] %s1231
      %1237 = dma.vmem_to_hbm [thread:$0]  %s1232, 256, %s15, [#allocation3], 128, 128, 8
    $region65: #{tpu_custom_call.1} parent=1 // pred_fallthru
      _
    // Predicated region
    $region66: #{tpu_custom_call.1} parent=1 // pred_check
      _
    $region67: #{tpu_custom_call.1} parent=1 // pred_check_branch
      %1239 = sbr.rel (0) target = $region69
    $region68: #{tpu_custom_call.1} parent=1 // pred_region
      %1240 = dma.done [#allocation3], 256
    $region69: #{tpu_custom_call.1} parent=1 // pred_fallthru
      _
    %1241 = vsyncpa [#allocation3], 1

</llo_original>
